<compile_context>
chip_gen: v7x
topology: tpu7x:2x2x1
jax: 0.10.0
libtpu: 0.0.40
codegen_flags: <defaults>
</compile_context>

<pallas_src>
import functools

import jax
import jax.numpy as jnp
import numpy as np
from jax.experimental import pallas as pl
from jax.experimental.pallas import tpu as pltpu

_TBL_GROUP = 16                 # rows per bf16 component: row 4*v + c  (rows 3,7,11..15 zero)
_TBL_ROWS = 3 * _TBL_GROUP      # hi / mid / lo components -> 48 rows total


def _sigmoid(x):
    # numerically-stable sigmoid (same function torch.sigmoid computes)
    return 0.5 * (jnp.tanh(0.5 * x) + 1.0)


def _shader_kernel(packed_ref, table_ref, out_ref, *, K, F_chunk, num_chunks,
                   sigma, gamma, background_color, znear, zfar):
    # packed_ref: (1, 6K, T) f32.  Row c6*K + k: c6=0 pix_to_face (exact float, -1.0 = bg),
    #             c6=1 zbuf, c6=2 dists, c6=3+v bary coord of vertex v — all for face slot k.
    # table_ref : (48, F_pad) bf16.  Row comp*16 + v*4 + c = component `comp` of the
    #             per-face vertex-normal (vertex v, channel c); hi+mid+lo sum to f32.
    # out_ref   : (1, 4, T) f32 RGBA, lane-dense.
    eps = 1e-10
    T = out_ref.shape[2]

    p2f = packed_ref[0, 0:K, :]                          # (K, T) float face ids
    zbuf = packed_ref[0, K:2 * K, :]                     # (K, T)
    dists = packed_ref[0, 2 * K:3 * K, :]                # (K, T)
    bary = packed_ref[0, 3 * K:6 * K, :]                 # (3K, T), row v*K + k (one hoisted load)
    maskf = (p2f >= 0.0).astype(jnp.float32)

    # ---- softmax_rgb_blend weights (K on sublanes, T lane-dense) -----------------------
    prob = _sigmoid(-dists / sigma) * maskf              # (K, T)
    one_m = 1.0 - prob
    alpha = one_m[0:1, :]                                # alpha = prod_k (1 - prob_k)
    for k in range(1, K):
        alpha = alpha * one_m[k:k + 1, :]                # (1, T)

    z_inv = (zfar - zbuf) / (zfar - znear) * maskf                        # (K, T)
    z_inv_max = jnp.maximum(jnp.max(z_inv, axis=0, keepdims=True), eps)   # (1, T)
    w = prob * jnp.exp((z_inv - z_inv_max) / gamma)                       # (K, T)
    delta = jnp.maximum(jnp.exp((eps - z_inv_max) / gamma), eps)          # (1, T)
    denom = jnp.sum(w, axis=0, keepdims=True) + delta                     # (1, T)

    # ---- interpolate_face_attributes: ONE fused one-hot MXU gather for all K slots -----
    # RHS lane order is [slot 0 | slot 1 | ... | slot K-1]; background ids (-1) match no
    # iota value, so those columns gather zeros and need no extra masking.
    p2f_cat = jnp.concatenate([p2f[k:k + 1, :] for k in range(K)], axis=1)        # (1, K*T)
    bary_cat = [jnp.concatenate([bary[v * K + k:v * K + k + 1, :] for k in range(K)],
                                axis=1) for v in range(3)]                         # 3 x (1, K*T)
    iota0 = jax.lax.broadcasted_iota(jnp.int32, (F_chunk, 1), 0).astype(jnp.float32)

    g = None
    # Faces are chunked so the one-hot temporaries stay O(F_chunk * K * T) for any mesh.
    for j in range(num_chunks):
        one_hot = ((iota0 + float(j * F_chunk)) == p2f_cat).astype(jnp.bfloat16)   # (Fc, K*T)
        tbl_j = table_ref[:, j * F_chunk:(j + 1) * F_chunk]                        # (48, Fc)
        d = jnp.dot(tbl_j, one_hot, preferred_element_type=jnp.float32)            # (48, K*T)
        g = d if g is None else g + d

    # hi + mid + lo reassembles the exact f32 normals; 8-aligned 16-row slices.
    gsum = (g[0:_TBL_GROUP, :] + g[_TBL_GROUP:2 * _TBL_GROUP, :]
            + g[2 * _TBL_GROUP:3 * _TBL_GROUP, :])                                 # (16, K*T)
    pn = bary_cat[0] * gsum[0:3, :]                                                # (3, K*T)
    for v in range(1, 3):
        pn = pn + bary_cat[v] * gsum[4 * v:4 * v + 3, :]

    # ---- w-weighted sum over the K slots (lane-aligned T-wide slices) ------------------
    wc = w[0:1, :] * pn[:, 0:T]
    for k in range(1, K):
        wc = wc + w[k:k + 1, :] * pn[:, k * T:(k + 1) * T]                         # (3, T)

    inv_denom = pl.reciprocal(denom, approx=False)       # exact: keeps the 1e-5 validation tight
    rows = [(wc[c:c + 1, :] + delta * background_color[c]) * inv_denom for c in range(3)]
    rows.append(1.0 - alpha)
    out_ref[0, :, :] = jnp.concatenate(rows, axis=0)     # one lane-dense (4, T) store


def _ceil_to(x, m):
    return ((x + m - 1) // m) * m


@functools.lru_cache(maxsize=1)
def _vmem_capacity_bytes():
    try:
        return int(pltpu.get_tpu_info().vmem_capacity_bytes)
    except Exception:
        return 64 * 1024 * 1024   # conservative (v7x-sized) fallback


def _pick_tile_hw(HW, N, K, F_chunk, F_pad, vmem_budget_bytes, max_tile_hw):
    """Largest 128-multiple lane tile whose blocks + gather temporaries fit the budget."""
    HW128 = _ceil_to(HW, 128)
    per_lane = (2 * 6 * K * 4                       # packed input block, double-buffered
                + 2 * 4 * 4                         # output block, double-buffered
                + F_chunk * K * 6                   # one-hot (bf16) + compare/broadcast temps
                + (_TBL_ROWS + 24) * K * 4          # MXU result + gsum/pn temporaries
                + 16 * K * 4)                       # blend temporaries (prob, w, z_inv, ...)
    # constant face table counted at 2x (default double buffering) + compiler slack
    fixed = 2 * _TBL_ROWS * F_pad * 2 + (2 << 20)
    cap = (vmem_budget_bytes - fixed) // per_lane
    cap = max(128, min((int(cap) // 128) * 128, max_tile_hw, HW128))
    # prefer a tile that exactly divides the 128-padded pixel count (no padded lanes) ...
    tile, t = 128, 128
    while t <= cap:
        if HW128 % t == 0:
            tile = t
        t += 128
    # ... unless that leaves most of the cap unused; then pad H*W up instead.
    if 2 * tile <= cap:
        tile = cap
    # keep >= 2 grid programs when possible so both v7x TensorCores get work
    if N == 1 and HW128 > 128 and _ceil_to(HW128, tile) // tile < 2:
        tile = ((HW128 // 128 + 1) // 2) * 128
    return tile


def _build_face_table(faces, verts_normals, F_pad):
    """(48, F_pad) bf16 table; row comp*16 + v*4 + c.

    Invariants (per review): normals are normalized f32, so the hi/mid/lo bf16 split below
    reconstructs them to within ~1 f32 ulp when summed in f32; the one-hot gather has a
    single nonzero per column, so the MXU introduces no accumulation rounding.
    """
    F = faces.shape[0]
    fn = verts_normals[faces].astype(jnp.float32)                  # (F, 3 verts, 3 ch)
    base = jnp.zeros((_TBL_GROUP, F), jnp.float32)
    for v in range(3):
        base = base.at[4 * v:4 * v + 3, :].set(fn[:, v, :].T)
    hi = base.astype(jnp.bfloat16)
    r1 = base - hi.astype(jnp.float32)
    mid = r1.astype(jnp.bfloat16)
    lo = (r1 - mid.astype(jnp.float32)).astype(jnp.bfloat16)
    table = jnp.concatenate([hi, mid, lo], axis=0)                 # (48, F)
    return jnp.pad(table, ((0, 0), (0, F_pad - F)))                # (48, F_pad)


@functools.partial(jax.jit, static_argnames=(
    "sigma", "gamma", "background_color", "znear", "zfar", "tile_hw", "f_chunk"))
def normal_shader_forward(pix_to_face, bary_coords, zbuf, dists, faces, verts_normals, *,
                          sigma=1e-4, gamma=1e-4, background_color=(1.0, 1.0, 1.0),
                          znear=1.0, zfar=100.0, tile_hw=None, f_chunk=None):
    """NormalShader.forward. Returns images of shape (N, H, W, 4), float32."""
    N, H, W, K = pix_to_face.shape
    F = faces.shape[0]
    assert F < (1 << 24), "face ids are carried as exact f32; requires F < 2^24"
    HW = H * W

    # --- face chunking / padding ---------------------------------------------------------
    F_pad128 = _ceil_to(F, 128)
    F_chunk = _ceil_to(f_chunk, 128) if f_chunk is not None else min(F_pad128, 512)
    F_pad = _ceil_to(F_pad128, F_chunk)
    num_chunks = F_pad // F_chunk

    # --- per-generation VMEM sizing ------------------------------------------------------
    vmem_cap = _vmem_capacity_bytes()
    vmem_limit = min((vmem_cap * 3) // 4, 100 * 1024 * 1024)   # ~48 MiB v7x, ~96 MiB v5e/v6e
    budget = (vmem_limit * 4) // 5
    max_tile = 8192 if vmem_cap >= (100 << 20) else 2048
    if tile_hw is None:
        tile_hw = _pick_tile_hw(HW, N, K, F_chunk, F_pad, budget, max_tile)
    assert tile_hw % 128 == 0, "pixel tile must be a multiple of 128 lanes"
    HW_pad = _ceil_to(HW, tile_hw)

    table = _build_face_table(faces, verts_normals, F_pad)

    # --- pack every per-(pixel, slot) input into ONE (N, 6K, HW_pad) f32 array ------------
    # TODO(synk): this pack + transpose is one extra fused HBM read+write pass over the
    # fragment buffers; consuming the raster (..., K)-last layout directly would need an
    # in-kernel K de-interleave (lane-strided relayout) or an upstream layout change.
    p2f_f = pix_to_face.astype(jnp.float32)                        # exact for F < 2^24
    chans = jnp.stack([p2f_f, zbuf.astype(jnp.float32), dists.astype(jnp.float32)],
                      axis=3)                                      # (N, H, W, 3, K)
    bary_t = jnp.moveaxis(bary_coords.astype(jnp.float32), -1, 3)  # (N, H, W, 3, K)
    packed = jnp.concatenate([chans, bary_t], axis=3)              # (N, H, W, 6, K)
    packed = packed.reshape(N, HW, 6 * K).transpose(0, 2, 1)       # (N, 6K, HW)
    if HW_pad != HW:
        # padded columns look like face 0 with zero bary/dists/zbuf: finite, and discarded.
        packed = jnp.pad(packed, ((0, 0), (0, 0), (0, HW_pad - HW)))

    kernel = functools.partial(
        _shader_kernel, K=K, F_chunk=F_chunk, num_chunks=num_chunks,
        sigma=float(sigma), gamma=float(gamma),
        background_color=tuple(float(b) for b in background_color),
        znear=float(znear), zfar=float(zfar))

    grid = (N, HW_pad // tile_hw)
    out = pl.pallas_call(
        kernel,
        out_shape=jax.ShapeDtypeStruct((N, 4, HW_pad), jnp.float32),
        grid_spec=pltpu.PrefetchScalarGridSpec(
            num_scalar_prefetch=0,
            grid=grid,
            in_specs=[
                pl.BlockSpec((1, 6 * K, tile_hw), lambda n, t: (n, 0, t)),   # packed fragments
                # constant face table: never re-fetched; its 2x (double-buffered) size is
                # already counted in the VMEM budget instead of forcing single-buffering.
                pl.BlockSpec((_TBL_ROWS, F_pad), lambda n, t: (0, 0)),
            ],
            out_specs=pl.BlockSpec((1, 4, tile_hw), lambda n, t: (n, 0, t)),
        ),
        compiler_params=pltpu.CompilerParams(
            dimension_semantics=("parallel", "parallel"),
            vmem_limit_bytes=int(vmem_limit)),
    )(packed, table)

    out = out[:, :, :HW]
    # TODO(synk): downstream consumers that accept (N, 4, H*W) should skip this transpose.
    return out.transpose(0, 2, 1).reshape(N, H, W, 4)


def normal_shader_reference(pix_to_face, bary_coords, zbuf, dists, faces, verts_normals,
                            sigma=1e-4, gamma=1e-4, background_color=(1.0, 1.0, 1.0),
                            znear=1.0, zfar=100.0):
    """Pure-JAX reference mirroring the PyTorch module (for validation)."""
    eps = 1e-10
    faces_normals = verts_normals[faces]                               # (F, 3, 3)
    mask = pix_to_face >= 0
    maskf = mask.astype(jnp.float32)
    idx = jnp.where(mask, pix_to_face, 0)
    pix_face_normals = faces_normals[idx]                              # (N,H,W,K,3,3)
    pixel_normals = jnp.sum(bary_coords[..., None] * pix_face_normals, axis=-2)
    pixel_normals = jnp.where(mask[..., None], pixel_normals, 0.0)

    prob = _sigmoid(-dists / sigma) * maskf
    alpha = jnp.prod(1.0 - prob, axis=-1)
    z_inv = (zfar - zbuf) / (zfar - znear) * maskf
    z_inv_max = jnp.maximum(jnp.max(z_inv, axis=-1, keepdims=True), eps)
    w = prob * jnp.exp((z_inv - z_inv_max) / gamma)
    delta = jnp.maximum(jnp.exp((eps - z_inv_max) / gamma), eps)
    denom = jnp.sum(w, axis=-1, keepdims=True) + delta
    bg = jnp.asarray(background_color, jnp.float32)
    weighted_colors = jnp.sum(w[..., None] * pixel_normals, axis=-2)
    rgb = (weighted_colors + delta * bg) / denom
    return jnp.concatenate([rgb, (1.0 - alpha)[..., None]], axis=-1)


if __name__ == "__main__":
    key = jax.random.PRNGKey(0)
    N, H, W, K = 2, 16, 16, 4      # fragments: (N, H, W, K)
    V, F = 8, 12                   # small synthetic mesh (cube-like: 8 verts, 12 faces)
    k1, k2, k3, k4, k5, k6 = jax.random.split(key, 6)

    faces = jax.random.randint(k1, (F, 3), 0, V, dtype=jnp.int32)
    vn = jax.random.normal(k2, (V, 3), jnp.float32)
    verts_normals = vn / jnp.linalg.norm(vn, axis=-1, keepdims=True)

    # fragments (pix_to_face uses int32 instead of torch's int64; -1 = background)
    pix_to_face = jax.random.randint(k3, (N, H, W, K), -1, F, dtype=jnp.int32)
    b = jax.random.uniform(k4, (N, H, W, K, 3), jnp.float32, 1e-3, 1.0)
    bary_coords = b / jnp.sum(b, axis=-1, keepdims=True)
    zbuf_fg = jax.random.uniform(k5, (N, H, W, K), jnp.float32, 1.0, 100.0)
    zbuf = jnp.where(pix_to_face >= 0, zbuf_fg, -1.0)
    dists_fg = jax.random.uniform(k6, (N, H, W, K), jnp.float32, -5e-4, 5e-4)
    dists = jnp.where(pix_to_face >= 0, dists_fg, -1.0)

    images = jax.block_until_ready(
        normal_shader_forward(pix_to_face, bary_coords, zbuf, dists, faces, verts_normals))
    ref = normal_shader_reference(pix_to_face, bary_coords, zbuf, dists, faces, verts_normals)

    assert images.shape == (N, H, W, 4) and images.dtype == jnp.float32
    np.testing.assert_allclose(np.asarray(images), np.asarray(ref), rtol=1e-5, atol=1e-5)
    print("KERNEL_OK")
</pallas_src>

<mosaic_0001>
module attributes {stable_mosaic.version = 11 : i64} {
  func.func @_shader_kernel(%arg0: i32, %arg1: i32, %arg2: memref<1x24x256xf32, #tpu.memory_space<vmem>>, %arg3: memref<48x128xbf16, #tpu.memory_space<vmem>>, %arg4: memref<1x4x256xf32, #tpu.memory_space<vmem>>) attributes {dimension_semantics = [#tpu.dimension_semantics<parallel>, #tpu.dimension_semantics<parallel>], iteration_bounds = array<i64: 2, 1>, scalar_prefetch = 0 : i64, scratch_operands = 0 : i64, tpu.core_type = #tpu.core_type<tc>, window_params = [{transform_indices = @transform_0, window_bounds = array<i64: 1, 24, 256>}, {pipeline_mode = #tpu.pipeline_mode<synchronous>, transform_indices = @transform_1, window_bounds = array<i64: 48, 128>}, {transform_indices = @transform_2, window_bounds = array<i64: 1, 4, 256>}]} {
    %c0 = arith.constant 0 : index
    %c0_0 = arith.constant 0 : index
    %c0_1 = arith.constant 0 : index
    %0 = vector.load %arg2[%c0, %c0_0, %c0_1] : memref<1x24x256xf32, #tpu.memory_space<vmem>>, vector<1x4x256xf32>
    %1 = vector.shape_cast %0 : vector<1x4x256xf32> to vector<4x256xf32>
    %c0_2 = arith.constant 0 : index
    %c4 = arith.constant 4 : index
    %c0_3 = arith.constant 0 : index
    %2 = vector.load %arg2[%c0_2, %c4, %c0_3] : memref<1x24x256xf32, #tpu.memory_space<vmem>>, vector<1x4x256xf32>
    %3 = vector.shape_cast %2 : vector<1x4x256xf32> to vector<4x256xf32>
    %c0_4 = arith.constant 0 : index
    %c8 = arith.constant 8 : index
    %c0_5 = arith.constant 0 : index
    %4 = vector.load %arg2[%c0_4, %c8, %c0_5] : memref<1x24x256xf32, #tpu.memory_space<vmem>>, vector<1x4x256xf32>
    %5 = vector.shape_cast %4 : vector<1x4x256xf32> to vector<4x256xf32>
    %c0_6 = arith.constant 0 : index
    %c12 = arith.constant 12 : index
    %c0_7 = arith.constant 0 : index
    %6 = vector.load %arg2[%c0_6, %c12, %c0_7] : memref<1x24x256xf32, #tpu.memory_space<vmem>>, vector<1x12x256xf32>
    %7 = vector.shape_cast %6 : vector<1x12x256xf32> to vector<12x256xf32>
    %cst = arith.constant 0.000000e+00 : f32
    %8 = vector.broadcast %cst : f32 to vector<4x256xf32>
    %9 = arith.cmpf oge, %1, %8 : vector<4x256xf32>
    %10 = arith.extui %9 : vector<4x256xi1> to vector<4x256xi32>
    %11 = arith.sitofp %10 : vector<4x256xi32> to vector<4x256xf32>
    %cst_8 = arith.constant 0.000000e+00 : f32
    %12 = vector.broadcast %cst_8 : f32 to vector<4x256xf32>
    %13 = arith.subf %12, %5 : vector<4x256xf32>
    %cst_9 = arith.constant 9.99999974E-5 : f32
    %14 = vector.broadcast %cst_9 : f32 to vector<4x256xf32>
    %15 = arith.divf %13, %14 : vector<4x256xf32>
    %cst_10 = arith.constant 5.000000e-01 : f32
    %16 = vector.broadcast %cst_10 : f32 to vector<4x256xf32>
    %17 = arith.mulf %16, %15 : vector<4x256xf32>
    %18 = math.tanh %17 : vector<4x256xf32>
    %cst_11 = arith.constant 1.000000e+00 : f32
    %19 = vector.broadcast %cst_11 : f32 to vector<4x256xf32>
    %20 = arith.addf %18, %19 : vector<4x256xf32>
    %cst_12 = arith.constant 5.000000e-01 : f32
    %21 = vector.broadcast %cst_12 : f32 to vector<4x256xf32>
    %22 = arith.mulf %21, %20 : vector<4x256xf32>
    %23 = arith.mulf %22, %11 : vector<4x256xf32>
    %cst_13 = arith.constant 1.000000e+00 : f32
    %24 = vector.broadcast %cst_13 : f32 to vector<4x256xf32>
    %25 = arith.subf %24, %23 : vector<4x256xf32>
    %26 = vector.extract_strided_slice %25 {offsets = [0, 0], sizes = [1, 256], strides = [1, 1]} : vector<4x256xf32> to vector<1x256xf32>
    %27 = vector.extract_strided_slice %25 {offsets = [1, 0], sizes = [1, 256], strides = [1, 1]} : vector<4x256xf32> to vector<1x256xf32>
    %28 = arith.mulf %26, %27 : vector<1x256xf32>
    %29 = vector.extract_strided_slice %25 {offsets = [2, 0], sizes = [1, 256], strides = [1, 1]} : vector<4x256xf32> to vector<1x256xf32>
    %30 = arith.mulf %28, %29 : vector<1x256xf32>
    %31 = vector.extract_strided_slice %25 {offsets = [3, 0], sizes = [1, 256], strides = [1, 1]} : vector<4x256xf32> to vector<1x256xf32>
    %32 = arith.mulf %30, %31 : vector<1x256xf32>
    %cst_14 = arith.constant 1.000000e+02 : f32
    %33 = vector.broadcast %cst_14 : f32 to vector<4x256xf32>
    %34 = arith.subf %33, %3 : vector<4x256xf32>
    %cst_15 = arith.constant 9.900000e+01 : f32
    %35 = vector.broadcast %cst_15 : f32 to vector<4x256xf32>
    %36 = arith.divf %34, %35 : vector<4x256xf32>
    %37 = arith.mulf %36, %11 : vector<4x256xf32>
    %cst_16 = arith.constant dense<0xFF800000> : vector<256xf32>
    %38 = vector.multi_reduction <maximumf>, %37, %cst_16 [0] : vector<4x256xf32> to vector<256xf32>
    %39 = vector.shape_cast %38 : vector<256xf32> to vector<1x256xf32>
    %cst_17 = arith.constant 1.000000e-10 : f32
    %40 = vector.broadcast %cst_17 : f32 to vector<1x256xf32>
    %41 = arith.maximumf %39, %40 : vector<1x256xf32>
    %42 = vector.broadcast %41 : vector<1x256xf32> to vector<4x256xf32>
    %43 = arith.subf %37, %42 : vector<4x256xf32>
    %cst_18 = arith.constant 9.99999974E-5 : f32
    %44 = vector.broadcast %cst_18 : f32 to vector<4x256xf32>
    %45 = arith.divf %43, %44 : vector<4x256xf32>
    %46 = math.exp %45 : vector<4x256xf32>
    %47 = arith.mulf %23, %46 : vector<4x256xf32>
    %cst_19 = arith.constant 1.000000e-10 : f32
    %48 = vector.broadcast %cst_19 : f32 to vector<1x256xf32>
    %49 = arith.subf %48, %41 : vector<1x256xf32>
    %cst_20 = arith.constant 9.99999974E-5 : f32
    %50 = vector.broadcast %cst_20 : f32 to vector<1x256xf32>
    %51 = arith.divf %49, %50 : vector<1x256xf32>
    %52 = math.exp %51 : vector<1x256xf32>
    %cst_21 = arith.constant 1.000000e-10 : f32
    %53 = vector.broadcast %cst_21 : f32 to vector<1x256xf32>
    %54 = arith.maximumf %52, %53 : vector<1x256xf32>
    %cst_22 = arith.constant dense<0.000000e+00> : vector<256xf32>
    %55 = vector.multi_reduction <add>, %47, %cst_22 [0] : vector<4x256xf32> to vector<256xf32>
    %56 = vector.shape_cast %55 : vector<256xf32> to vector<1x256xf32>
    %57 = arith.addf %56, %54 : vector<1x256xf32>
    %58 = vector.extract_strided_slice %1 {offsets = [0, 0], sizes = [1, 256], strides = [1, 1]} : vector<4x256xf32> to vector<1x256xf32>
    %59 = vector.extract_strided_slice %1 {offsets = [1, 0], sizes = [1, 256], strides = [1, 1]} : vector<4x256xf32> to vector<1x256xf32>
    %60 = vector.extract_strided_slice %1 {offsets = [2, 0], sizes = [1, 256], strides = [1, 1]} : vector<4x256xf32> to vector<1x256xf32>
    %61 = vector.extract_strided_slice %1 {offsets = [3, 0], sizes = [1, 256], strides = [1, 1]} : vector<4x256xf32> to vector<1x256xf32>
    %62 = tpu.concatenate %58, %59, %60, %61 in 1 : vector<1x256xf32>, vector<1x256xf32>, vector<1x256xf32>, vector<1x256xf32> -> vector<1x1024xf32>
    %63 = vector.extract_strided_slice %7 {offsets = [0, 0], sizes = [1, 256], strides = [1, 1]} : vector<12x256xf32> to vector<1x256xf32>
    %64 = vector.extract_strided_slice %7 {offsets = [1, 0], sizes = [1, 256], strides = [1, 1]} : vector<12x256xf32> to vector<1x256xf32>
    %65 = vector.extract_strided_slice %7 {offsets = [2, 0], sizes = [1, 256], strides = [1, 1]} : vector<12x256xf32> to vector<1x256xf32>
    %66 = vector.extract_strided_slice %7 {offsets = [3, 0], sizes = [1, 256], strides = [1, 1]} : vector<12x256xf32> to vector<1x256xf32>
    %67 = tpu.concatenate %63, %64, %65, %66 in 1 : vector<1x256xf32>, vector<1x256xf32>, vector<1x256xf32>, vector<1x256xf32> -> vector<1x1024xf32>
    %68 = vector.extract_strided_slice %7 {offsets = [4, 0], sizes = [1, 256], strides = [1, 1]} : vector<12x256xf32> to vector<1x256xf32>
    %69 = vector.extract_strided_slice %7 {offsets = [5, 0], sizes = [1, 256], strides = [1, 1]} : vector<12x256xf32> to vector<1x256xf32>
    %70 = vector.extract_strided_slice %7 {offsets = [6, 0], sizes = [1, 256], strides = [1, 1]} : vector<12x256xf32> to vector<1x256xf32>
    %71 = vector.extract_strided_slice %7 {offsets = [7, 0], sizes = [1, 256], strides = [1, 1]} : vector<12x256xf32> to vector<1x256xf32>
    %72 = tpu.concatenate %68, %69, %70, %71 in 1 : vector<1x256xf32>, vector<1x256xf32>, vector<1x256xf32>, vector<1x256xf32> -> vector<1x1024xf32>
    %73 = vector.extract_strided_slice %7 {offsets = [8, 0], sizes = [1, 256], strides = [1, 1]} : vector<12x256xf32> to vector<1x256xf32>
    %74 = vector.extract_strided_slice %7 {offsets = [9, 0], sizes = [1, 256], strides = [1, 1]} : vector<12x256xf32> to vector<1x256xf32>
    %75 = vector.extract_strided_slice %7 {offsets = [10, 0], sizes = [1, 256], strides = [1, 1]} : vector<12x256xf32> to vector<1x256xf32>
    %76 = vector.extract_strided_slice %7 {offsets = [11, 0], sizes = [1, 256], strides = [1, 1]} : vector<12x256xf32> to vector<1x256xf32>
    %77 = tpu.concatenate %73, %74, %75, %76 in 1 : vector<1x256xf32>, vector<1x256xf32>, vector<1x256xf32>, vector<1x256xf32> -> vector<1x1024xf32>
    %78 = tpu.iota {dimensions = array<i32: 0>} : vector<128x1xi32>
    %79 = arith.sitofp %78 : vector<128x1xi32> to vector<128x1xf32>
    %cst_23 = arith.constant 0.000000e+00 : f32
    %80 = vector.broadcast %cst_23 : f32 to vector<128x1xf32>
    %81 = arith.addf %79, %80 : vector<128x1xf32>
    %82 = vector.broadcast %81 : vector<128x1xf32> to vector<128x1024xf32>
    %83 = vector.broadcast %62 : vector<1x1024xf32> to vector<128x1024xf32>
    %84 = arith.cmpf oeq, %82, %83 : vector<128x1024xf32>
    %85 = arith.extui %84 : vector<128x1024xi1> to vector<128x1024xi32>
    %86 = arith.sitofp %85 : vector<128x1024xi32> to vector<128x1024xf32>
    %87 = arith.truncf %86 : vector<128x1024xf32> to vector<128x1024xbf16>
    %c0_24 = arith.constant 0 : index
    %c0_25 = arith.constant 0 : index
    %88 = vector.load %arg3[%c0_24, %c0_25] : memref<48x128xbf16, #tpu.memory_space<vmem>>, vector<48x128xbf16>
    %cst_26 = arith.constant dense<0.000000e+00> : vector<48x1024xf32>
    %89 = tpu.matmul %88, %87, %cst_26 {dimension_numbers = #tpu.dot_dimension_numbers<[1], [0], [0], [1], [0, 0, 1, 1], [], []>} : vector<48x128xbf16>, vector<128x1024xbf16>, vector<48x1024xf32> -> vector<48x1024xf32>
    %90 = vector.extract_strided_slice %89 {offsets = [0, 0], sizes = [16, 1024], strides = [1, 1]} : vector<48x1024xf32> to vector<16x1024xf32>
    %91 = vector.extract_strided_slice %89 {offsets = [16, 0], sizes = [16, 1024], strides = [1, 1]} : vector<48x1024xf32> to vector<16x1024xf32>
    %92 = arith.addf %90, %91 : vector<16x1024xf32>
    %93 = vector.extract_strided_slice %89 {offsets = [32, 0], sizes = [16, 1024], strides = [1, 1]} : vector<48x1024xf32> to vector<16x1024xf32>
    %94 = arith.addf %92, %93 : vector<16x1024xf32>
    %95 = vector.extract_strided_slice %94 {offsets = [0, 0], sizes = [3, 1024], strides = [1, 1]} : vector<16x1024xf32> to vector<3x1024xf32>
    %96 = vector.broadcast %67 : vector<1x1024xf32> to vector<3x1024xf32>
    %97 = arith.mulf %96, %95 : vector<3x1024xf32>
    %98 = vector.extract_strided_slice %94 {offsets = [4, 0], sizes = [3, 1024], strides = [1, 1]} : vector<16x1024xf32> to vector<3x1024xf32>
    %99 = vector.broadcast %72 : vector<1x1024xf32> to vector<3x1024xf32>
    %100 = arith.mulf %99, %98 : vector<3x1024xf32>
    %101 = arith.addf %97, %100 : vector<3x1024xf32>
    %102 = vector.extract_strided_slice %94 {offsets = [8, 0], sizes = [3, 1024], strides = [1, 1]} : vector<16x1024xf32> to vector<3x1024xf32>
    %103 = vector.broadcast %77 : vector<1x1024xf32> to vector<3x1024xf32>
    %104 = arith.mulf %103, %102 : vector<3x1024xf32>
    %105 = arith.addf %101, %104 : vector<3x1024xf32>
    %106 = vector.extract_strided_slice %47 {offsets = [0, 0], sizes = [1, 256], strides = [1, 1]} : vector<4x256xf32> to vector<1x256xf32>
    %107 = vector.extract_strided_slice %105 {offsets = [0, 0], sizes = [3, 256], strides = [1, 1]} : vector<3x1024xf32> to vector<3x256xf32>
    %108 = vector.broadcast %106 : vector<1x256xf32> to vector<3x256xf32>
    %109 = arith.mulf %108, %107 : vector<3x256xf32>
    %110 = vector.extract_strided_slice %47 {offsets = [1, 0], sizes = [1, 256], strides = [1, 1]} : vector<4x256xf32> to vector<1x256xf32>
    %111 = vector.extract_strided_slice %105 {offsets = [0, 256], sizes = [3, 256], strides = [1, 1]} : vector<3x1024xf32> to vector<3x256xf32>
    %112 = vector.broadcast %110 : vector<1x256xf32> to vector<3x256xf32>
    %113 = arith.mulf %112, %111 : vector<3x256xf32>
    %114 = arith.addf %109, %113 : vector<3x256xf32>
    %115 = vector.extract_strided_slice %47 {offsets = [2, 0], sizes = [1, 256], strides = [1, 1]} : vector<4x256xf32> to vector<1x256xf32>
    %116 = vector.extract_strided_slice %105 {offsets = [0, 512], sizes = [3, 256], strides = [1, 1]} : vector<3x1024xf32> to vector<3x256xf32>
    %117 = vector.broadcast %115 : vector<1x256xf32> to vector<3x256xf32>
    %118 = arith.mulf %117, %116 : vector<3x256xf32>
    %119 = arith.addf %114, %118 : vector<3x256xf32>
    %120 = vector.extract_strided_slice %47 {offsets = [3, 0], sizes = [1, 256], strides = [1, 1]} : vector<4x256xf32> to vector<1x256xf32>
    %121 = vector.extract_strided_slice %105 {offsets = [0, 768], sizes = [3, 256], strides = [1, 1]} : vector<3x1024xf32> to vector<3x256xf32>
    %122 = vector.broadcast %120 : vector<1x256xf32> to vector<3x256xf32>
    %123 = arith.mulf %122, %121 : vector<3x256xf32>
    %124 = arith.addf %119, %123 : vector<3x256xf32>
    %125 = tpu.reciprocal %57 : vector<1x256xf32> -> vector<1x256xf32>
    %126 = vector.extract_strided_slice %124 {offsets = [0, 0], sizes = [1, 256], strides = [1, 1]} : vector<3x256xf32> to vector<1x256xf32>
    %cst_27 = arith.constant 1.000000e+00 : f32
    %127 = vector.broadcast %cst_27 : f32 to vector<1x256xf32>
    %128 = arith.mulf %54, %127 : vector<1x256xf32>
    %129 = arith.addf %126, %128 : vector<1x256xf32>
    %130 = arith.mulf %129, %125 : vector<1x256xf32>
    %131 = vector.extract_strided_slice %124 {offsets = [1, 0], sizes = [1, 256], strides = [1, 1]} : vector<3x256xf32> to vector<1x256xf32>
    %cst_28 = arith.constant 1.000000e+00 : f32
    %132 = vector.broadcast %cst_28 : f32 to vector<1x256xf32>
    %133 = arith.mulf %54, %132 : vector<1x256xf32>
    %134 = arith.addf %131, %133 : vector<1x256xf32>
    %135 = arith.mulf %134, %125 : vector<1x256xf32>
    %136 = vector.extract_strided_slice %124 {offsets = [2, 0], sizes = [1, 256], strides = [1, 1]} : vector<3x256xf32> to vector<1x256xf32>
    %cst_29 = arith.constant 1.000000e+00 : f32
    %137 = vector.broadcast %cst_29 : f32 to vector<1x256xf32>
    %138 = arith.mulf %54, %137 : vector<1x256xf32>
    %139 = arith.addf %136, %138 : vector<1x256xf32>
    %140 = arith.mulf %139, %125 : vector<1x256xf32>
    %cst_30 = arith.constant 1.000000e+00 : f32
    %141 = vector.broadcast %cst_30 : f32 to vector<1x256xf32>
    %142 = arith.subf %141, %32 : vector<1x256xf32>
    %143 = tpu.concatenate %130, %135, %140, %142 in 0 : vector<1x256xf32>, vector<1x256xf32>, vector<1x256xf32>, vector<1x256xf32> -> vector<4x256xf32>
    %c0_31 = arith.constant 0 : index
    %c0_32 = arith.constant 0 : index
    %c0_33 = arith.constant 0 : index
    %144 = vector.load %arg4[%c0_31, %c0_32, %c0_33] : memref<1x4x256xf32, #tpu.memory_space<vmem>>, vector<1x4x256xf32>
    %145 = vector.shape_cast %144 : vector<1x4x256xf32> to vector<4x256xf32>
    %146 = vector.shape_cast %143 : vector<4x256xf32> to vector<1x4x256xf32>
    tpu.vector_store %arg4[%c0_31, %c0_32, %c0_33], %146 {strides = array<i32>} : memref<1x4x256xf32, #tpu.memory_space<vmem>>, vector<1x4x256xf32>,
    return
  }
  func.func @transform_0(%arg0: i32, %arg1: i32) -> (i32, i32, i32) {
    %c0_i32 = arith.constant 0 : i32
    %c0_i32_0 = arith.constant 0 : i32
    return %arg0, %c0_i32, %arg1 : i32, i32, i32
  }
  func.func @transform_1(%arg0: i32, %arg1: i32) -> (i32, i32) {
    %c0_i32 = arith.constant 0 : i32
    %c0_i32_0 = arith.constant 0 : i32
    %c0_i32_1 = arith.constant 0 : i32
    return %c0_i32, %c0_i32_0 : i32, i32
  }
  func.func @transform_2(%arg0: i32, %arg1: i32) -> (i32, i32, i32) {
    %c0_i32 = arith.constant 0 : i32
    %c0_i32_0 = arith.constant 0 : i32
    return %arg0, %c0_i32, %arg1 : i32, i32, i32
  }
}

</mosaic_0001>

<llo_original>
// kernel: normal_shader_forward.1
$region0: #{normal_shader_forward.1}
  #allocation0 [shape = 'u32[]', space=smem, size = 0x4, offset = 0x4, fixed_abs, tag = 'smem constant byte address 0x4 - core index']
  #allocation1 [shape = 'u32[144,128]{1,0:T(1,128)}', space=vmem, size = 0x12000, scoped, tag = 'internal scratch']
  %s0 = inlined_call_operand.vmem [shape: f32[2,24,256], index: 0, kind: input, shape index: {}]
  %s1 = inlined_call_operand.vmem [shape: bf16[48,128], index: 1, kind: input, shape index: {}]
  %s2 = inlined_call_operand.vmem [shape: f32[2,4,256], index: 2, kind: output, shape index: {}]
  %s3 = sld [smem:[#allocation0]]
  $region41: #{normal_shader_forward.1} parent=0
    _
  %s5 = ssub.s32 1, %s3
  %s6 = scalar_select 0, %s5, %s3
  loop: start=0, step=1, limit=4
  $region2: #{normal_shader_forward.1} parent=0 // loop_pre_header
    _
  $region3: #{normal_shader_forward.1} parent=0 // loop_header
    %s8 = sphi 0, %s12
    %p9 = scmp.ge.s32.totalorder %s8, 4
    %s15 = sphi 0, %s27
    %s16 = sphi 0, %s23
    %s17 = sphi 0, %s15
    %s18 = sphi 0, %s16
    %s19 = sphi 0, %s17
    %s20 = sphi 0, %s18
    %s32 = sphi 0, %s34
    %s35 = sphi 0, %s32
    %s36 = sphi 0, %s35
    %s52 = sphi 0, %s36
    %s56 = sphi 0, %s56
    %s58 = sphi 0, %s56
    %s59 = sphi 0, %s58
    %s73 = sphi 0, %s59
    %s81 = sphi 0, %s83
    %s84 = sphi 0, %s81
    %s85 = sphi 0, %s84
    %s101 = sphi 0, %s85
  $region4: #{normal_shader_forward.1} parent=0 // loop_header_branch
    %11 = sbr.rel (%p9) target = $region8
  $region5: #{normal_shader_forward.1} parent=0 // loop_body
    %s13 = ssub.s32 %s8, 1
    %s14 = ssub.s32 %s8, 2
    %s21 = sadd.s32 1, %s16
    %p22 = scmp.ge.s32.totalorder %s21, 1
    %s23 = scalar_select %p22, 0, %s21
    %s24 = sadd.s32 1, %s15
    %s25 = scalar_select %p22, %s24, %s15
    %p26 = scmp.ge.s32.totalorder %s25, 2
    %s27 = scalar_select %p26, 0, %s25
    %s28 = ssub.s32 %s15, %s27
    %s29 = ssub.s32 %s16, %s23
    %s30 = sor.u32 %s28, %s29
    %p31 = scmp.eq.s32.totalorder %s30, 0
    %s33 = sadd.s32 %s32, 1
    %s34 = scalar_select %p31, %s32, %s33
    %p37 = pneg %p31
    %p38 = scmp.eq.s32.totalorder %s8, 1
    %p39 = por %p37, %p38
    %p40 = scmp.ne.s32.totalorder %s32, %s35
    %p41 = scmp.eq.s32.totalorder %s8, 0
    %p42 = por %p40, %p41
    %p43 = scmp.ne.s32.totalorder %s32, %s35
    %p44 = scmp.eq.s32.totalorder %s13, 1
    %p45 = por %p43, %p44
    %p46 = scmp.ne.s32.totalorder %s35, %s36
    %p47 = scmp.eq.s32.totalorder %s13, 0
    %p48 = por %p46, %p47
    %p49 = scmp.ne.s32.totalorder %s35, %s36
    %p50 = scmp.eq.s32.totalorder %s14, 1
    %p51 = por %p49, %p50
    %p53 = scmp.ne.s32.totalorder %s36, %s52
    %p54 = scmp.eq.s32.totalorder %s14, 0
    %p55 = por %p53, %p54
    %s57 = sadd.s32 %s56, 1
    %p60 = scmp.eq.s32.totalorder %s8, 1
    %p61 = scmp.ne.s32.totalorder %s56, %s58
    %p62 = scmp.eq.s32.totalorder %s8, 0
    %p63 = por %p61, %p62
    %p64 = scmp.ne.s32.totalorder %s56, %s58
    %p65 = scmp.eq.s32.totalorder %s13, 1
    %p66 = por %p64, %p65
    %p67 = scmp.ne.s32.totalorder %s58, %s59
    %p68 = scmp.eq.s32.totalorder %s13, 0
    %p69 = por %p67, %p68
    %p70 = scmp.ne.s32.totalorder %s58, %s59
    %p71 = scmp.eq.s32.totalorder %s14, 1
    %p72 = por %p70, %p71
    %p74 = scmp.ne.s32.totalorder %s59, %s73
    %p75 = scmp.eq.s32.totalorder %s14, 0
    %p76 = por %p74, %p75
    %s77 = ssub.s32 %s15, %s27
    %s78 = ssub.s32 %s16, %s23
    %s79 = sor.u32 %s77, %s78
    %p80 = scmp.eq.s32.totalorder %s79, 0
    %s82 = sadd.s32 %s81, 1
    %s83 = scalar_select %p80, %s81, %s82
    %p86 = pneg %p80
    %p87 = scmp.eq.s32.totalorder %s8, 1
    %p88 = por %p86, %p87
    %p89 = scmp.ne.s32.totalorder %s81, %s84
    %p90 = scmp.eq.s32.totalorder %s8, 0
    %p91 = por %p89, %p90
    %p92 = scmp.ne.s32.totalorder %s81, %s84
    %p93 = scmp.eq.s32.totalorder %s13, 1
    %p94 = por %p92, %p93
    %p95 = scmp.ne.s32.totalorder %s84, %s85
    %p96 = scmp.eq.s32.totalorder %s13, 0
    %p97 = por %p95, %p96
    %p98 = scmp.ne.s32.totalorder %s84, %s85
    %p99 = scmp.eq.s32.totalorder %s14, 1
    %p100 = por %p98, %p99
    %p102 = scmp.ne.s32.totalorder %s85, %s101
    %p103 = scmp.eq.s32.totalorder %s14, 0
    %p104 = por %p102, %p103
    %p105 = scmp.le.s32.totalorder 1, %s8
    %p106 = scmp.lt.s32.totalorder %s8, 3
    %p107 = pnand %p105, %p106
    %p108 = pneg %p107
    // Predicated region
    $region9: #{normal_shader_forward.1} parent=5 // pred_check
      _
    $region10: #{normal_shader_forward.1} parent=5 // pred_check_branch
      %110 = sbr.rel (%p107) target = $region12
    $region11: #{normal_shader_forward.1} parent=5 // pred_region
      %s111 = ssub.s32 %s8, 1
      // Predicated region
      $region13: #{normal_shader_forward.1} parent=11 // pred_check
        %p112 = pneg %p69
      $region14: #{normal_shader_forward.1} parent=11 // pred_check_branch
        %114 = sbr.rel (%p112) target = $region16
      $region15: #{normal_shader_forward.1} parent=11 // pred_region
        _
      $region16: #{normal_shader_forward.1} parent=11 // pred_fallthru
        _
    $region12: #{normal_shader_forward.1} parent=5 // pred_fallthru
      _
    %p115 = scmp.lt.s32.totalorder %s8, 2
    // Predicated region
    $region17: #{normal_shader_forward.1} parent=5 // pred_check
      %p116 = pneg %p115
    $region18: #{normal_shader_forward.1} parent=5 // pred_check_branch
      %118 = sbr.rel (%p116) target = $region20
    $region19: #{normal_shader_forward.1} parent=5 // pred_region
      // Predicated region
      $region21: #{normal_shader_forward.1} parent=19 // pred_check
        %p119 = pneg %p42
      $region22: #{normal_shader_forward.1} parent=19 // pred_check_branch
        %121 = sbr.rel (%p119) target = $region24
      $region23: #{normal_shader_forward.1} parent=19 // pred_region
        %s122 = smul.u32 2, %s16
        %p123 = scmp.lt.s32.totalorder %s15, 1
        %s124 = scalar_select %p123, %s15, 1
        %p125 = scmp.lt.s32.totalorder %s122, 1
        %s126 = scalar_select %p125, %s122, 1
        %s127 = smul.addr %s124, 6
        %s128 = sadd.s32 %s126, %s127
        %s129 = smul.addr %s128, 8
        %s130 = scalar_lea.vmem %s0, %s129
        %s131 = smul.u32 2, %s16
      $region24: #{normal_shader_forward.1} parent=19 // pred_fallthru
        _
    $region20: #{normal_shader_forward.1} parent=5 // pred_fallthru
      _
    %p132 = scmp.le.s32.totalorder 1, %s8
    %p133 = scmp.lt.s32.totalorder %s8, 3
    %p134 = pnand %p132, %p133
    %p135 = pneg %p134
    // Predicated region
    $region25: #{normal_shader_forward.1} parent=5 // pred_check
      _
    $region26: #{normal_shader_forward.1} parent=5 // pred_check_branch
      %137 = sbr.rel (%p134) target = $region28
    $region27: #{normal_shader_forward.1} parent=5 // pred_region
      %s138 = ssub.s32 %s8, 1
      %s139 = smul.u32 2, %s18
      %p140 = scmp.lt.s32.totalorder %s17, 1
      %s141 = scalar_select %p140, %s17, 1
      %p142 = scmp.lt.s32.totalorder %s139, 1
      %s143 = scalar_select %p142, %s139, 1
      %s144 = smul.addr %s141, 6
      %s145 = sadd.s32 %s143, %s144
      %s146 = smul.addr %s145, 8
      %s147 = scalar_lea.vmem %s0, %s146
      %p148 = pneg %p48
      %p149 = pneg %p45
      %p150 = pneg %p69
      %p151 = pneg %p66
      %p152 = pneg %p97
      %p153 = pneg %p94
      %s154 = smul.u32 2, %s18
      %p155 = scmp.lt.s32.totalorder %s17, 1
      %s156 = scalar_select %p155, %s17, 1
      %p157 = scmp.lt.s32.totalorder %s154, 1
      %s158 = scalar_select %p157, %s154, 1
      %s159 = smul.addr %s156, 2
      %s160 = sadd.s32 %s158, %s159
      %s161 = smul.addr %s160, 4
      %s162 = scalar_lea.vmem %s2, %s161
      %s163 = smul.u32 2, %s18
      %p164 = scmp.lt.s32.totalorder %s17, 1
      %s165 = scalar_select %p164, %s17, 1
      %p166 = scmp.lt.s32.totalorder %s163, 1
      %s167 = scalar_select %p166, %s163, 1
      %s168 = smul.addr %s165, 6
      %s169 = sadd.s32 %s167, %s168
      %s170 = smul.addr %s169, 8
      %s171 = scalar_lea.vmem %s0, %s170
      %s172 = smul.u32 2, %s18
      %s173 = smul.u32 2, %s18
      %p174 = scmp.lt.s32.totalorder %s17, 1
      %s175 = scalar_select %p174, %s17, 1
      %p176 = scmp.lt.s32.totalorder %s173, 1
      %s177 = scalar_select %p176, %s173, 1
      %s178 = smul.addr %s175, 2
      %s179 = sadd.s32 %s177, %s178
      %s180 = smul.addr %s179, 4
      %s181 = scalar_lea.vmem %s2, %s180
      %s182 = smul.u32 2, %s18
      %v184 = vld [vmem:[%s171] sm:$0xf]
      %v185 = vld [vmem:[%s171 + $0x8] sm:$0xf]
      %v186 = vld [vmem:[%s171] sm:$0xf0]
      %v187 = vld [vmem:[%s171 + $0x8] sm:$0xf0]
      %v188 = vld [vmem:[%s171 + $0x10] sm:$0xf]
      %v189 = vld [vmem:[%s171 + $0x18] sm:$0xf]
      %v190 = vld [vmem:[%s171 + $0x10] sm:$0xf0]
      %v191 = vld [vmem:[%s171 + $0x18] sm:$0xf0]
      %v192 = vld [vmem:[%s171 + $0x20] sm:$0xff]
      %v193 = vld [vmem:[%s171 + $0x28] sm:$0xff]
      %vm194 = vcmp.ge.f32.partialorder %v184, 0.0
      %vm195 = vcmp.ge.f32.partialorder %v185, 0.0
      %v196 = vsel %vm194, 1, 0
      %v197 = vsel %vm195, 1, 0
      %v198 = vcvt.s32.f32 %v196
      %v199 = vcvt.s32.f32 %v197
      %v200 = vsub.f32 0.0, %v188
      %v201 = vsub.f32 0.0, %v189
      %v202 = vrcp.pop 0.0001
      %v203 = vmul.f32 %v200, %v202
      %v204 = vmul.f32 %v201, %v202
      %v205 = vmul.f32 %v203, 0.5
      %v206 = vmul.f32 %v204, 0.5
      %v207 = vtanh.pop %v205
      %v208 = vtanh.pop %v206
      %v209 = vadd.f32 %v207, 1.0
      %v210 = vadd.f32 %v208, 1.0
      %v211 = vmul.f32 %v209, 0.5
      %v212 = vmul.f32 %v210, 0.5
      %v213 = vmul.f32 %v211, %v198
      %v214 = vmul.f32 %v212, %v199
      %v215 = vsub.f32 1.0, %v213
      %v216 = vsub.f32 1.0, %v214
      %v219 = vrot.slane %v215, 1
      %v220 = vrot.slane %v216, 1
      %v223 = vmul.f32 %v215, %v219
      %v224 = vmul.f32 %v216, %v220
      %v225 = vrot.slane %v215, 2
      %v226 = vrot.slane %v216, 2
      %v229 = vmul.f32 %v223, %v225
      %v230 = vmul.f32 %v224, %v226
      %v231 = vrot.slane %v215, 3
      %v232 = vrot.slane %v216, 3
      %v235 = vmul.f32 %v229, %v231
      %v236 = vmul.f32 %v230, %v232
      %v237 = vsub.f32 100.0, %v186
      %v238 = vsub.f32 100.0, %v187
      %v239 = vrcp.pop 99.0
      %v240 = vmul.f32 %v237, %v239
      %v241 = vmul.f32 %v238, %v239
      %v244 = vrot.slane %v198, 4
      %v245 = vrot.slane %v199, 4
      %v248 = vmul.f32 %v240, %v244
      %v249 = vmul.f32 %v241, %v245
      %vm250 = vcmask 1047556
      %v251 = vsel %vm250, %v248, -inf
      %v252 = vrot.slane %v251, 4
      %v253 = vmax.f32 %v251, %v252
      %v254 = vrot.slane %v253, 2
      %v255 = vmax.f32 %v253, %v254
      %v256 = vrot.slane %v255, 1
      %v257 = vmax.f32 %v255, %v256
      %v258 = vsel %vm250, %v249, -inf
      %v259 = vrot.slane %v258, 4
      %v260 = vmax.f32 %v258, %v259
      %v261 = vrot.slane %v260, 2
      %v262 = vmax.f32 %v260, %v261
      %v263 = vrot.slane %v262, 1
      %v264 = vmax.f32 %v262, %v263
      %v265 = vmax.f32 %v257, 1e-10
      %v266 = vmax.f32 %v264, 1e-10
      %v267 = vsub.f32 %v248, %v265
      %v268 = vsub.f32 %v249, %v266
      %v269 = vmul.f32 %v267, %v202
      %v270 = vmul.f32 %v268, %v202
      %v271 = vmul.f32 %v269, 1.442695
      %v272 = vpow.pop %v271
      %v273 = vmul.f32 %v270, 1.442695
      %v274 = vpow.pop %v273
      %v277 = vrot.slane %v272, 4
      %v278 = vrot.slane %v274, 4
      %v281 = vmul.f32 %v213, %v277
      %v282 = vmul.f32 %v214, %v278
      %v283 = vsub.f32 1e-10, %v265
      %v284 = vsub.f32 1e-10, %v266
      %v285 = vmul.f32 %v283, %v202
      %v286 = vmul.f32 %v284, %v202
      %v287 = vmul.f32 %v285, 1.442695
      %v288 = vpow.pop %v287
      %v289 = vmul.f32 %v286, 1.442695
      %v290 = vpow.pop %v289
      %v291 = vmax.f32 %v288, 1e-10
      %v292 = vmax.f32 %v290, 1e-10
      %vm293 = vcmask 1043456
      %v294 = vsel %vm293, %v281, 0.0
      %v295 = vrot.slane %v294, 4
      %v296 = vadd.f32 %v294, %v295
      %v297 = vrot.slane %v296, 2
      %v298 = vadd.f32 %v296, %v297
      %v299 = vrot.slane %v298, 1
      %v300 = vadd.f32 %v298, %v299
      %v301 = vsel %vm293, %v282, 0.0
      %v302 = vrot.slane %v301, 4
      %v303 = vadd.f32 %v301, %v302
      %v304 = vrot.slane %v303, 2
      %v305 = vadd.f32 %v303, %v304
      %v306 = vrot.slane %v305, 1
      %v307 = vadd.f32 %v305, %v306
      %v308 = vadd.f32 %v300, %v291
      %v309 = vadd.f32 %v307, %v292
      %v312 = vrot.slane %v184, 1
      %v313 = vrot.slane %v185, 1
      %v316 = vrot.slane %v184, 2
      %v317 = vrot.slane %v185, 2
      %v320 = vrot.slane %v184, 3
      %v321 = vrot.slane %v185, 3
      %v326 = vrot.slane %v190, 1
      %v327 = vrot.slane %v191, 1
      %v330 = vrot.slane %v190, 2
      %v331 = vrot.slane %v191, 2
      %v334 = vrot.slane %v190, 3
      %v335 = vrot.slane %v191, 3
      %v340 = vrot.slane %v192, 1
      %v341 = vrot.slane %v193, 1
      %v344 = vrot.slane %v192, 2
      %v345 = vrot.slane %v193, 2
      %v348 = vrot.slane %v192, 3
      %v349 = vrot.slane %v193, 3
      %v352 = vlaneseq
      %v353 = vshrl.u32 %v352, 7
      %v354 = vadd.s32 %v353, 8
      %v355 = vadd.s32 %v353, 16
      %v356 = vadd.s32 %v353, 24
      %v357 = vadd.s32 %v353, 32
      %v358 = vadd.s32 %v353, 40
      %v359 = vadd.s32 %v353, 48
      %v360 = vadd.s32 %v353, 56
      %v361 = vadd.s32 %v353, 64
      %v362 = vadd.s32 %v353, 72
      %v363 = vadd.s32 %v353, 80
      %v364 = vadd.s32 %v353, 88
      %v365 = vadd.s32 %v353, 96
      %v366 = vadd.s32 %v353, 104
      %v367 = vadd.s32 %v353, 112
      %v368 = vadd.s32 %v353, 120
      %v369 = vcvt.s32.f32 %v353
      %v370 = vcvt.s32.f32 %v354
      %v371 = vcvt.s32.f32 %v355
      %v372 = vcvt.s32.f32 %v356
      %v373 = vcvt.s32.f32 %v357
      %v374 = vcvt.s32.f32 %v358
      %v375 = vcvt.s32.f32 %v359
      %v376 = vcvt.s32.f32 %v360
      %v377 = vcvt.s32.f32 %v361
      %v378 = vcvt.s32.f32 %v362
      %v379 = vcvt.s32.f32 %v363
      %v380 = vcvt.s32.f32 %v364
      %v381 = vcvt.s32.f32 %v365
      %v382 = vcvt.s32.f32 %v366
      %v383 = vcvt.s32.f32 %v367
      %v384 = vcvt.s32.f32 %v368
      %v385 = vadd.f32 %v369, 0.0
      %v386 = vadd.f32 %v370, 0.0
      %v387 = vadd.f32 %v371, 0.0
      %v388 = vadd.f32 %v372, 0.0
      %v389 = vadd.f32 %v373, 0.0
      %v390 = vadd.f32 %v374, 0.0
      %v391 = vadd.f32 %v375, 0.0
      %v392 = vadd.f32 %v376, 0.0
      %v393 = vadd.f32 %v377, 0.0
      %v394 = vadd.f32 %v378, 0.0
      %v395 = vadd.f32 %v379, 0.0
      %v396 = vadd.f32 %v380, 0.0
      %v397 = vadd.f32 %v381, 0.0
      %v398 = vadd.f32 %v382, 0.0
      %v399 = vadd.f32 %v383, 0.0
      %v400 = vadd.f32 %v384, 0.0
      %v401 = vlaneseq
      %v402 = vshrl.u32 %v401, 7
      %v403 = vsub.s32 0, %v402
      %v404 = vrot.slane %v184, %v403
      %v405 = vlaneseq
      %v406 = vshrl.u32 %v405, 7
      %v407 = vsub.s32 0, %v406
      %v408 = vrot.slane %v185, %v407
      %v409 = vlaneseq
      %v410 = vshrl.u32 %v409, 7
      %v411 = vsub.s32 0, %v410
      %v412 = vrot.slane %v312, %v411
      %v413 = vlaneseq
      %v414 = vshrl.u32 %v413, 7
      %v415 = vsub.s32 0, %v414
      %v416 = vrot.slane %v313, %v415
      %v417 = vlaneseq
      %v418 = vshrl.u32 %v417, 7
      %v419 = vsub.s32 0, %v418
      %v420 = vrot.slane %v316, %v419
      %v421 = vlaneseq
      %v422 = vshrl.u32 %v421, 7
      %v423 = vsub.s32 0, %v422
      %v424 = vrot.slane %v317, %v423
      %v425 = vlaneseq
      %v426 = vshrl.u32 %v425, 7
      %v427 = vsub.s32 0, %v426
      %v428 = vrot.slane %v320, %v427
      %v429 = vlaneseq
      %v430 = vshrl.u32 %v429, 7
      %v431 = vsub.s32 0, %v430
      %v432 = vrot.slane %v321, %v431
      %vm433 = vcmp.eq.f32.partialorder %v385, %v404
      %vm434 = vcmp.eq.f32.partialorder %v385, %v408
      %vm435 = vcmp.eq.f32.partialorder %v385, %v412
      %vm436 = vcmp.eq.f32.partialorder %v385, %v416
      %vm437 = vcmp.eq.f32.partialorder %v385, %v420
      %vm438 = vcmp.eq.f32.partialorder %v385, %v424
      %vm439 = vcmp.eq.f32.partialorder %v385, %v428
      %vm440 = vcmp.eq.f32.partialorder %v385, %v432
      %vm441 = vcmp.eq.f32.partialorder %v386, %v404
      %vm442 = vcmp.eq.f32.partialorder %v386, %v408
      %vm443 = vcmp.eq.f32.partialorder %v386, %v412
      %vm444 = vcmp.eq.f32.partialorder %v386, %v416
      %vm445 = vcmp.eq.f32.partialorder %v386, %v420
      %vm446 = vcmp.eq.f32.partialorder %v386, %v424
      %vm447 = vcmp.eq.f32.partialorder %v386, %v428
      %vm448 = vcmp.eq.f32.partialorder %v386, %v432
      %vm449 = vcmp.eq.f32.partialorder %v387, %v404
      %vm450 = vcmp.eq.f32.partialorder %v387, %v408
      %vm451 = vcmp.eq.f32.partialorder %v387, %v412
      %vm452 = vcmp.eq.f32.partialorder %v387, %v416
      %vm453 = vcmp.eq.f32.partialorder %v387, %v420
      %vm454 = vcmp.eq.f32.partialorder %v387, %v424
      %vm455 = vcmp.eq.f32.partialorder %v387, %v428
      %vm456 = vcmp.eq.f32.partialorder %v387, %v432
      %vm457 = vcmp.eq.f32.partialorder %v388, %v404
      %vm458 = vcmp.eq.f32.partialorder %v388, %v408
      %vm459 = vcmp.eq.f32.partialorder %v388, %v412
      %vm460 = vcmp.eq.f32.partialorder %v388, %v416
      %vm461 = vcmp.eq.f32.partialorder %v388, %v420
      %vm462 = vcmp.eq.f32.partialorder %v388, %v424
      %vm463 = vcmp.eq.f32.partialorder %v388, %v428
      %vm464 = vcmp.eq.f32.partialorder %v388, %v432
      %vm465 = vcmp.eq.f32.partialorder %v389, %v404
      %vm466 = vcmp.eq.f32.partialorder %v389, %v408
      %vm467 = vcmp.eq.f32.partialorder %v389, %v412
      %vm468 = vcmp.eq.f32.partialorder %v389, %v416
      %vm469 = vcmp.eq.f32.partialorder %v389, %v420
      %vm470 = vcmp.eq.f32.partialorder %v389, %v424
      %vm471 = vcmp.eq.f32.partialorder %v389, %v428
      %vm472 = vcmp.eq.f32.partialorder %v389, %v432
      %vm473 = vcmp.eq.f32.partialorder %v390, %v404
      %vm474 = vcmp.eq.f32.partialorder %v390, %v408
      %vm475 = vcmp.eq.f32.partialorder %v390, %v412
      %vm476 = vcmp.eq.f32.partialorder %v390, %v416
      %vm477 = vcmp.eq.f32.partialorder %v390, %v420
      %vm478 = vcmp.eq.f32.partialorder %v390, %v424
      %vm479 = vcmp.eq.f32.partialorder %v390, %v428
      %vm480 = vcmp.eq.f32.partialorder %v390, %v432
      %vm481 = vcmp.eq.f32.partialorder %v391, %v404
      %vm482 = vcmp.eq.f32.partialorder %v391, %v408
      %vm483 = vcmp.eq.f32.partialorder %v391, %v412
      %vm484 = vcmp.eq.f32.partialorder %v391, %v416
      %vm485 = vcmp.eq.f32.partialorder %v391, %v420
      %vm486 = vcmp.eq.f32.partialorder %v391, %v424
      %vm487 = vcmp.eq.f32.partialorder %v391, %v428
      %vm488 = vcmp.eq.f32.partialorder %v391, %v432
      %vm489 = vcmp.eq.f32.partialorder %v392, %v404
      %vm490 = vcmp.eq.f32.partialorder %v392, %v408
      %vm491 = vcmp.eq.f32.partialorder %v392, %v412
      %vm492 = vcmp.eq.f32.partialorder %v392, %v416
      %vm493 = vcmp.eq.f32.partialorder %v392, %v420
      %vm494 = vcmp.eq.f32.partialorder %v392, %v424
      %vm495 = vcmp.eq.f32.partialorder %v392, %v428
      %vm496 = vcmp.eq.f32.partialorder %v392, %v432
      %vm497 = vcmp.eq.f32.partialorder %v393, %v404
      %vm498 = vcmp.eq.f32.partialorder %v393, %v408
      %vm499 = vcmp.eq.f32.partialorder %v393, %v412
      %vm500 = vcmp.eq.f32.partialorder %v393, %v416
      %vm501 = vcmp.eq.f32.partialorder %v393, %v420
      %vm502 = vcmp.eq.f32.partialorder %v393, %v424
      %vm503 = vcmp.eq.f32.partialorder %v393, %v428
      %vm504 = vcmp.eq.f32.partialorder %v393, %v432
      %vm505 = vcmp.eq.f32.partialorder %v394, %v404
      %vm506 = vcmp.eq.f32.partialorder %v394, %v408
      %vm507 = vcmp.eq.f32.partialorder %v394, %v412
      %vm508 = vcmp.eq.f32.partialorder %v394, %v416
      %vm509 = vcmp.eq.f32.partialorder %v394, %v420
      %vm510 = vcmp.eq.f32.partialorder %v394, %v424
      %vm511 = vcmp.eq.f32.partialorder %v394, %v428
      %vm512 = vcmp.eq.f32.partialorder %v394, %v432
      %vm513 = vcmp.eq.f32.partialorder %v395, %v404
      %vm514 = vcmp.eq.f32.partialorder %v395, %v408
      %vm515 = vcmp.eq.f32.partialorder %v395, %v412
      %vm516 = vcmp.eq.f32.partialorder %v395, %v416
      %vm517 = vcmp.eq.f32.partialorder %v395, %v420
      %vm518 = vcmp.eq.f32.partialorder %v395, %v424
      %vm519 = vcmp.eq.f32.partialorder %v395, %v428
      %vm520 = vcmp.eq.f32.partialorder %v395, %v432
      %vm521 = vcmp.eq.f32.partialorder %v396, %v404
      %vm522 = vcmp.eq.f32.partialorder %v396, %v408
      %vm523 = vcmp.eq.f32.partialorder %v396, %v412
      %vm524 = vcmp.eq.f32.partialorder %v396, %v416
      %vm525 = vcmp.eq.f32.partialorder %v396, %v420
      %vm526 = vcmp.eq.f32.partialorder %v396, %v424
      %vm527 = vcmp.eq.f32.partialorder %v396, %v428
      %vm528 = vcmp.eq.f32.partialorder %v396, %v432
      %vm529 = vcmp.eq.f32.partialorder %v397, %v404
      %vm530 = vcmp.eq.f32.partialorder %v397, %v408
      %vm531 = vcmp.eq.f32.partialorder %v397, %v412
      %vm532 = vcmp.eq.f32.partialorder %v397, %v416
      %vm533 = vcmp.eq.f32.partialorder %v397, %v420
      %vm534 = vcmp.eq.f32.partialorder %v397, %v424
      %vm535 = vcmp.eq.f32.partialorder %v397, %v428
      %vm536 = vcmp.eq.f32.partialorder %v397, %v432
      %vm537 = vcmp.eq.f32.partialorder %v398, %v404
      %vm538 = vcmp.eq.f32.partialorder %v398, %v408
      %vm539 = vcmp.eq.f32.partialorder %v398, %v412
      %vm540 = vcmp.eq.f32.partialorder %v398, %v416
      %vm541 = vcmp.eq.f32.partialorder %v398, %v420
      %vm542 = vcmp.eq.f32.partialorder %v398, %v424
      %vm543 = vcmp.eq.f32.partialorder %v398, %v428
      %vm544 = vcmp.eq.f32.partialorder %v398, %v432
      %vm545 = vcmp.eq.f32.partialorder %v399, %v404
      %vm546 = vcmp.eq.f32.partialorder %v399, %v408
      %vm547 = vcmp.eq.f32.partialorder %v399, %v412
      %vm548 = vcmp.eq.f32.partialorder %v399, %v416
      %vm549 = vcmp.eq.f32.partialorder %v399, %v420
      %vm550 = vcmp.eq.f32.partialorder %v399, %v424
      %vm551 = vcmp.eq.f32.partialorder %v399, %v428
      %vm552 = vcmp.eq.f32.partialorder %v399, %v432
      %vm553 = vcmp.eq.f32.partialorder %v400, %v404
      %vm554 = vcmp.eq.f32.partialorder %v400, %v408
      %vm555 = vcmp.eq.f32.partialorder %v400, %v412
      %vm556 = vcmp.eq.f32.partialorder %v400, %v416
      %vm557 = vcmp.eq.f32.partialorder %v400, %v420
      %vm558 = vcmp.eq.f32.partialorder %v400, %v424
      %vm559 = vcmp.eq.f32.partialorder %v400, %v428
      %vm560 = vcmp.eq.f32.partialorder %v400, %v432
      %v561 = vsel %vm433, 1, 0
      %v562 = vsel %vm434, 1, 0
      %v563 = vsel %vm435, 1, 0
      %v564 = vsel %vm436, 1, 0
      %v565 = vsel %vm437, 1, 0
      %v566 = vsel %vm438, 1, 0
      %v567 = vsel %vm439, 1, 0
      %v568 = vsel %vm440, 1, 0
      %v569 = vsel %vm441, 1, 0
      %v570 = vsel %vm442, 1, 0
      %v571 = vsel %vm443, 1, 0
      %v572 = vsel %vm444, 1, 0
      %v573 = vsel %vm445, 1, 0
      %v574 = vsel %vm446, 1, 0
      %v575 = vsel %vm447, 1, 0
      %v576 = vsel %vm448, 1, 0
      %v577 = vsel %vm449, 1, 0
      %v578 = vsel %vm450, 1, 0
      %v579 = vsel %vm451, 1, 0
      %v580 = vsel %vm452, 1, 0
      %v581 = vsel %vm453, 1, 0
      %v582 = vsel %vm454, 1, 0
      %v583 = vsel %vm455, 1, 0
      %v584 = vsel %vm456, 1, 0
      %v585 = vsel %vm457, 1, 0
      %v586 = vsel %vm458, 1, 0
      %v587 = vsel %vm459, 1, 0
      %v588 = vsel %vm460, 1, 0
      %v589 = vsel %vm461, 1, 0
      %v590 = vsel %vm462, 1, 0
      %v591 = vsel %vm463, 1, 0
      %v592 = vsel %vm464, 1, 0
      %v593 = vsel %vm465, 1, 0
      %v594 = vsel %vm466, 1, 0
      %v595 = vsel %vm467, 1, 0
      %v596 = vsel %vm468, 1, 0
      %v597 = vsel %vm469, 1, 0
      %v598 = vsel %vm470, 1, 0
      %v599 = vsel %vm471, 1, 0
      %v600 = vsel %vm472, 1, 0
      %v601 = vsel %vm473, 1, 0
      %v602 = vsel %vm474, 1, 0
      %v603 = vsel %vm475, 1, 0
      %v604 = vsel %vm476, 1, 0
      %v605 = vsel %vm477, 1, 0
      %v606 = vsel %vm478, 1, 0
      %v607 = vsel %vm479, 1, 0
      %v608 = vsel %vm480, 1, 0
      %v609 = vsel %vm481, 1, 0
      %v610 = vsel %vm482, 1, 0
      %v611 = vsel %vm483, 1, 0
      %v612 = vsel %vm484, 1, 0
      %v613 = vsel %vm485, 1, 0
      %v614 = vsel %vm486, 1, 0
      %v615 = vsel %vm487, 1, 0
      %v616 = vsel %vm488, 1, 0
      %v617 = vsel %vm489, 1, 0
      %v618 = vsel %vm490, 1, 0
      %v619 = vsel %vm491, 1, 0
      %v620 = vsel %vm492, 1, 0
      %v621 = vsel %vm493, 1, 0
      %v622 = vsel %vm494, 1, 0
      %v623 = vsel %vm495, 1, 0
      %v624 = vsel %vm496, 1, 0
      %v625 = vsel %vm497, 1, 0
      %v626 = vsel %vm498, 1, 0
      %v627 = vsel %vm499, 1, 0
      %v628 = vsel %vm500, 1, 0
      %v629 = vsel %vm501, 1, 0
      %v630 = vsel %vm502, 1, 0
      %v631 = vsel %vm503, 1, 0
      %v632 = vsel %vm504, 1, 0
      %v633 = vsel %vm505, 1, 0
      %v634 = vsel %vm506, 1, 0
      %v635 = vsel %vm507, 1, 0
      %v636 = vsel %vm508, 1, 0
      %v637 = vsel %vm509, 1, 0
      %v638 = vsel %vm510, 1, 0
      %v639 = vsel %vm511, 1, 0
      %v640 = vsel %vm512, 1, 0
      %v641 = vsel %vm513, 1, 0
      %v642 = vsel %vm514, 1, 0
      %v643 = vsel %vm515, 1, 0
      %v644 = vsel %vm516, 1, 0
      %v645 = vsel %vm517, 1, 0
      %v646 = vsel %vm518, 1, 0
      %v647 = vsel %vm519, 1, 0
      %v648 = vsel %vm520, 1, 0
      %v649 = vsel %vm521, 1, 0
      %v650 = vsel %vm522, 1, 0
      %v651 = vsel %vm523, 1, 0
      %v652 = vsel %vm524, 1, 0
      %v653 = vsel %vm525, 1, 0
      %v654 = vsel %vm526, 1, 0
      %v655 = vsel %vm527, 1, 0
      %v656 = vsel %vm528, 1, 0
      %v657 = vsel %vm529, 1, 0
      %v658 = vsel %vm530, 1, 0
      %v659 = vsel %vm531, 1, 0
      %v660 = vsel %vm532, 1, 0
      %v661 = vsel %vm533, 1, 0
      %v662 = vsel %vm534, 1, 0
      %v663 = vsel %vm535, 1, 0
      %v664 = vsel %vm536, 1, 0
      %v665 = vsel %vm537, 1, 0
      %v666 = vsel %vm538, 1, 0
      %v667 = vsel %vm539, 1, 0
      %v668 = vsel %vm540, 1, 0
      %v669 = vsel %vm541, 1, 0
      %v670 = vsel %vm542, 1, 0
      %v671 = vsel %vm543, 1, 0
      %v672 = vsel %vm544, 1, 0
      %v673 = vsel %vm545, 1, 0
      %v674 = vsel %vm546, 1, 0
      %v675 = vsel %vm547, 1, 0
      %v676 = vsel %vm548, 1, 0
      %v677 = vsel %vm549, 1, 0
      %v678 = vsel %vm550, 1, 0
      %v679 = vsel %vm551, 1, 0
      %v680 = vsel %vm552, 1, 0
      %v681 = vsel %vm553, 1, 0
      %v682 = vsel %vm554, 1, 0
      %v683 = vsel %vm555, 1, 0
      %v684 = vsel %vm556, 1, 0
      %v685 = vsel %vm557, 1, 0
      %v686 = vsel %vm558, 1, 0
      %v687 = vsel %vm559, 1, 0
      %v688 = vsel %vm560, 1, 0
      %v689 = vcvt.s32.f32 %v561
      %v690 = vcvt.s32.f32 %v562
      %v691 = vcvt.s32.f32 %v563
      %v692 = vcvt.s32.f32 %v564
      %v693 = vcvt.s32.f32 %v565
      %v694 = vcvt.s32.f32 %v566
      %v695 = vcvt.s32.f32 %v567
      %v696 = vcvt.s32.f32 %v568
      %v697 = vcvt.s32.f32 %v569
      %v698 = vcvt.s32.f32 %v570
      %v699 = vcvt.s32.f32 %v571
      %v700 = vcvt.s32.f32 %v572
      %v701 = vcvt.s32.f32 %v573
      %v702 = vcvt.s32.f32 %v574
      %v703 = vcvt.s32.f32 %v575
      %v704 = vcvt.s32.f32 %v576
      %v705 = vcvt.s32.f32 %v577
      %v706 = vcvt.s32.f32 %v578
      %v707 = vcvt.s32.f32 %v579
      %v708 = vcvt.s32.f32 %v580
      %v709 = vcvt.s32.f32 %v581
      %v710 = vcvt.s32.f32 %v582
      %v711 = vcvt.s32.f32 %v583
      %v712 = vcvt.s32.f32 %v584
      %v713 = vcvt.s32.f32 %v585
      %v714 = vcvt.s32.f32 %v586
      %v715 = vcvt.s32.f32 %v587
      %v716 = vcvt.s32.f32 %v588
      %v717 = vcvt.s32.f32 %v589
      %v718 = vcvt.s32.f32 %v590
      %v719 = vcvt.s32.f32 %v591
      %v720 = vcvt.s32.f32 %v592
      %v721 = vcvt.s32.f32 %v593
      %v722 = vcvt.s32.f32 %v594
      %v723 = vcvt.s32.f32 %v595
      %v724 = vcvt.s32.f32 %v596
      %v725 = vcvt.s32.f32 %v597
      %v726 = vcvt.s32.f32 %v598
      %v727 = vcvt.s32.f32 %v599
      %v728 = vcvt.s32.f32 %v600
      %v729 = vcvt.s32.f32 %v601
      %v730 = vcvt.s32.f32 %v602
      %v731 = vcvt.s32.f32 %v603
      %v732 = vcvt.s32.f32 %v604
      %v733 = vcvt.s32.f32 %v605
      %v734 = vcvt.s32.f32 %v606
      %v735 = vcvt.s32.f32 %v607
      %v736 = vcvt.s32.f32 %v608
      %v737 = vcvt.s32.f32 %v609
      %v738 = vcvt.s32.f32 %v610
      %v739 = vcvt.s32.f32 %v611
      %v740 = vcvt.s32.f32 %v612
      %v741 = vcvt.s32.f32 %v613
      %v742 = vcvt.s32.f32 %v614
      %v743 = vcvt.s32.f32 %v615
      %v744 = vcvt.s32.f32 %v616
      %v745 = vcvt.s32.f32 %v617
      %v746 = vcvt.s32.f32 %v618
      %v747 = vcvt.s32.f32 %v619
      %v748 = vcvt.s32.f32 %v620
      %v749 = vcvt.s32.f32 %v621
      %v750 = vcvt.s32.f32 %v622
      %v751 = vcvt.s32.f32 %v623
      %v752 = vcvt.s32.f32 %v624
      %v753 = vcvt.s32.f32 %v625
      %v754 = vcvt.s32.f32 %v626
      %v755 = vcvt.s32.f32 %v627
      %v756 = vcvt.s32.f32 %v628
      %v757 = vcvt.s32.f32 %v629
      %v758 = vcvt.s32.f32 %v630
      %v759 = vcvt.s32.f32 %v631
      %v760 = vcvt.s32.f32 %v632
      %v761 = vcvt.s32.f32 %v633
      %v762 = vcvt.s32.f32 %v634
      %v763 = vcvt.s32.f32 %v635
      %v764 = vcvt.s32.f32 %v636
      %v765 = vcvt.s32.f32 %v637
      %v766 = vcvt.s32.f32 %v638
      %v767 = vcvt.s32.f32 %v639
      %v768 = vcvt.s32.f32 %v640
      %v769 = vcvt.s32.f32 %v641
      %v770 = vcvt.s32.f32 %v642
      %v771 = vcvt.s32.f32 %v643
      %v772 = vcvt.s32.f32 %v644
      %v773 = vcvt.s32.f32 %v645
      %v774 = vcvt.s32.f32 %v646
      %v775 = vcvt.s32.f32 %v647
      %v776 = vcvt.s32.f32 %v648
      %v777 = vcvt.s32.f32 %v649
      %v778 = vcvt.s32.f32 %v650
      %v779 = vcvt.s32.f32 %v651
      %v780 = vcvt.s32.f32 %v652
      %v781 = vcvt.s32.f32 %v653
      %v782 = vcvt.s32.f32 %v654
      %v783 = vcvt.s32.f32 %v655
      %v784 = vcvt.s32.f32 %v656
      %v785 = vcvt.s32.f32 %v657
      %v786 = vcvt.s32.f32 %v658
      %v787 = vcvt.s32.f32 %v659
      %v788 = vcvt.s32.f32 %v660
      %v789 = vcvt.s32.f32 %v661
      %v790 = vcvt.s32.f32 %v662
      %v791 = vcvt.s32.f32 %v663
      %v792 = vcvt.s32.f32 %v664
      %v793 = vcvt.s32.f32 %v665
      %v794 = vcvt.s32.f32 %v666
      %v795 = vcvt.s32.f32 %v667
      %v796 = vcvt.s32.f32 %v668
      %v797 = vcvt.s32.f32 %v669
      %v798 = vcvt.s32.f32 %v670
      %v799 = vcvt.s32.f32 %v671
      %v800 = vcvt.s32.f32 %v672
      %v801 = vcvt.s32.f32 %v673
      %v802 = vcvt.s32.f32 %v674
      %v803 = vcvt.s32.f32 %v675
      %v804 = vcvt.s32.f32 %v676
      %v805 = vcvt.s32.f32 %v677
      %v806 = vcvt.s32.f32 %v678
      %v807 = vcvt.s32.f32 %v679
      %v808 = vcvt.s32.f32 %v680
      %v809 = vcvt.s32.f32 %v681
      %v810 = vcvt.s32.f32 %v682
      %v811 = vcvt.s32.f32 %v683
      %v812 = vcvt.s32.f32 %v684
      %v813 = vcvt.s32.f32 %v685
      %v814 = vcvt.s32.f32 %v686
      %v815 = vcvt.s32.f32 %v687
      %v816 = vcvt.s32.f32 %v688
      %v817 = vpack.c.bf16 %v697, %v689
      %v818 = vpack.c.bf16 %v698, %v690
      %v819 = vpack.c.bf16 %v699, %v691
      %v820 = vpack.c.bf16 %v700, %v692
      %v821 = vpack.c.bf16 %v701, %v693
      %v822 = vpack.c.bf16 %v702, %v694
      %v823 = vpack.c.bf16 %v703, %v695
      %v824 = vpack.c.bf16 %v704, %v696
      %v825 = vpack.c.bf16 %v713, %v705
      %v826 = vpack.c.bf16 %v714, %v706
      %v827 = vpack.c.bf16 %v715, %v707
      %v828 = vpack.c.bf16 %v716, %v708
      %v829 = vpack.c.bf16 %v717, %v709
      %v830 = vpack.c.bf16 %v718, %v710
      %v831 = vpack.c.bf16 %v719, %v711
      %v832 = vpack.c.bf16 %v720, %v712
      %v833 = vpack.c.bf16 %v729, %v721
      %v834 = vpack.c.bf16 %v730, %v722
      %v835 = vpack.c.bf16 %v731, %v723
      %v836 = vpack.c.bf16 %v732, %v724
      %v837 = vpack.c.bf16 %v733, %v725
      %v838 = vpack.c.bf16 %v734, %v726
      %v839 = vpack.c.bf16 %v735, %v727
      %v840 = vpack.c.bf16 %v736, %v728
      %v841 = vpack.c.bf16 %v745, %v737
      %v842 = vpack.c.bf16 %v746, %v738
      %v843 = vpack.c.bf16 %v747, %v739
      %v844 = vpack.c.bf16 %v748, %v740
      %v845 = vpack.c.bf16 %v749, %v741
      %v846 = vpack.c.bf16 %v750, %v742
      %v847 = vpack.c.bf16 %v751, %v743
      %v848 = vpack.c.bf16 %v752, %v744
      %v849 = vpack.c.bf16 %v761, %v753
      %v850 = vpack.c.bf16 %v762, %v754
      %v851 = vpack.c.bf16 %v763, %v755
      %v852 = vpack.c.bf16 %v764, %v756
      %v853 = vpack.c.bf16 %v765, %v757
      %v854 = vpack.c.bf16 %v766, %v758
      %v855 = vpack.c.bf16 %v767, %v759
      %v856 = vpack.c.bf16 %v768, %v760
      %v857 = vpack.c.bf16 %v777, %v769
      %v858 = vpack.c.bf16 %v778, %v770
      %v859 = vpack.c.bf16 %v779, %v771
      %v860 = vpack.c.bf16 %v780, %v772
      %v861 = vpack.c.bf16 %v781, %v773
      %v862 = vpack.c.bf16 %v782, %v774
      %v863 = vpack.c.bf16 %v783, %v775
      %v864 = vpack.c.bf16 %v784, %v776
      %v865 = vpack.c.bf16 %v793, %v785
      %v866 = vpack.c.bf16 %v794, %v786
      %v867 = vpack.c.bf16 %v795, %v787
      %v868 = vpack.c.bf16 %v796, %v788
      %v869 = vpack.c.bf16 %v797, %v789
      %v870 = vpack.c.bf16 %v798, %v790
      %v871 = vpack.c.bf16 %v799, %v791
      %v872 = vpack.c.bf16 %v800, %v792
      %v873 = vpack.c.bf16 %v809, %v801
      %v874 = vpack.c.bf16 %v810, %v802
      %v875 = vpack.c.bf16 %v811, %v803
      %v876 = vpack.c.bf16 %v812, %v804
      %v877 = vpack.c.bf16 %v813, %v805
      %v878 = vpack.c.bf16 %v814, %v806
      %v879 = vpack.c.bf16 %v815, %v807
      %v880 = vpack.c.bf16 %v816, %v808
      %v881 = vld [vmem:[%s1] sm:$0xf]
      %v882 = vld [vmem:[%s1 + $0x4] sm:$0xf]
      %v883 = vld [vmem:[%s1 + $0x8] sm:$0xf]
      %v884 = vld [vmem:[%s1 + $0xc] sm:$0xf]
      %v885 = vld [vmem:[%s1 + $0x10] sm:$0xf]
      %v886 = vld [vmem:[%s1 + $0x14] sm:$0xf]
      %v893 = vunpack.c.l.b16 %v881
      %v894 = vunpack.c.l.b16 %v882
      %v895 = vunpack.c.l.b16 %v883
      %v896 = vunpack.c.l.b16 %v884
      %v897 = vunpack.c.l.b16 %v885
      %v898 = vunpack.c.l.b16 %v886
      %v899 = vpack.c.b16 %v894, %v893
      %v900 = vpack.c.b16 %v896, %v895
      %v901 = vpack.c.b16 %v898, %v897
      %905 = vmatprep.subr.bf16.mxu0 %v818
      %906 = vmatpush1.bf16.msra.mxu0 %v817
      %907 = vmatprep.subr.bf16.mxu0 %v826
      %908 = vmatpush1.bf16.msra.mxu0 %v825
      %909 = vmatprep.subr.bf16.mxu0 %v834
      %910 = vmatpush1.bf16.msra.mxu0 %v833
      %911 = vmatprep.subr.bf16.mxu0 %v842
      %912 = vmatpush1.bf16.msra.mxu0 %v841
      %913 = vmatprep.subr.bf16.mxu0 %v850
      %914 = vmatpush1.bf16.msra.mxu0 %v849
      %915 = vmatprep.subr.bf16.mxu0 %v858
      %916 = vmatpush1.bf16.msra.mxu0 %v857
      %917 = vmatprep.subr.bf16.mxu0 %v866
      %918 = vmatpush1.bf16.msra.mxu0 %v865
      %919 = vmatprep.subr.bf16.mxu0 %v874
      %920 = vmatpush1.bf16.msra.mxu0 %v873
      %921 = vmatprep.subr.bf16.mxu0 0
      %922 = vmatpush1.bf16.msra.mxu0 0
      %923 = vmatprep.subr.bf16.mxu0 0
      %924 = vmatpush1.bf16.msra.mxu0 0
      %925 = vmatprep.subr.bf16.mxu0 0
      %926 = vmatpush1.bf16.msra.mxu0 0
      %927 = vmatprep.subr.bf16.mxu0 0
      %928 = vmatpush1.bf16.msra.mxu0 0
      %929 = vmatprep.subr.bf16.mxu0 0
      %930 = vmatpush1.bf16.msra.mxu0 0
      %931 = vmatprep.subr.bf16.mxu0 0
      %932 = vmatpush1.bf16.msra.mxu0 0
      %933 = vmatprep.subr.bf16.mxu0 0
      %934 = vmatpush1.bf16.msra.mxu0 0
      %935 = vmatprep.subr.bf16.mxu0 0
      %936 = vmatpush1.bf16.msra.mxu0 0
      %937 = vmatprep.mubr.bf16.mxu0 0
      %938 = vmatmul.mubr.bf16.gmra.mrb[0].mxu0 %v899
      %v939 = vpop.f32.mrb[0].mxu0
      %v940 = vadd.f32 0.0, %v939
      %v941 = vpop.f32.mrb[0].mxu0
      %v942 = vadd.f32 0.0, %v941
      %v943 = vpop.f32.mrb[0].mxu0
      %v944 = vadd.f32 0.0, %v943
      %v945 = vpop.f32.mrb[0].mxu0
      %v946 = vadd.f32 0.0, %v945
      %947 = vmatprep.mubr.bf16.mxu0 0
      %948 = vmatmul.mubr.bf16.gmra.mrb[0].mxu0 %v900
      %v949 = vpop.f32.mrb[0].mxu0
      %v950 = vadd.f32 0.0, %v949
      %v951 = vpop.f32.mrb[0].mxu0
      %v952 = vadd.f32 0.0, %v951
      %v953 = vpop.f32.mrb[0].mxu0
      %v954 = vadd.f32 0.0, %v953
      %v955 = vpop.f32.mrb[0].mxu0
      %v956 = vadd.f32 0.0, %v955
      %957 = vmatprep.mubr.bf16.mxu0 0
      %958 = vmatmul.mubr.bf16.gmra.mrb[0].mxu0 %v901
      %v959 = vpop.f32.mrb[0].mxu0
      %v960 = vadd.f32 0.0, %v959
      %v961 = vpop.f32.mrb[0].mxu0
      %v962 = vadd.f32 0.0, %v961
      %v963 = vpop.f32.mrb[0].mxu0
      %v964 = vadd.f32 0.0, %v963
      %v965 = vpop.f32.mrb[0].mxu0
      %v966 = vadd.f32 0.0, %v965
      %967 = vdwg.mxu0
      %968 = vmatprep.subr.bf16.mxu0 %v820
      %969 = vmatpush1.bf16.msra.mxu0 %v819
      %970 = vmatprep.subr.bf16.mxu0 %v828
      %971 = vmatpush1.bf16.msra.mxu0 %v827
      %972 = vmatprep.subr.bf16.mxu0 %v836
      %973 = vmatpush1.bf16.msra.mxu0 %v835
      %974 = vmatprep.subr.bf16.mxu0 %v844
      %975 = vmatpush1.bf16.msra.mxu0 %v843
      %976 = vmatprep.subr.bf16.mxu0 %v852
      %977 = vmatpush1.bf16.msra.mxu0 %v851
      %978 = vmatprep.subr.bf16.mxu0 %v860
      %979 = vmatpush1.bf16.msra.mxu0 %v859
      %980 = vmatprep.subr.bf16.mxu0 %v868
      %981 = vmatpush1.bf16.msra.mxu0 %v867
      %982 = vmatprep.subr.bf16.mxu0 %v876
      %983 = vmatpush1.bf16.msra.mxu0 %v875
      %984 = vmatprep.subr.bf16.mxu0 0
      %985 = vmatpush1.bf16.msra.mxu0 0
      %986 = vmatprep.subr.bf16.mxu0 0
      %987 = vmatpush1.bf16.msra.mxu0 0
      %988 = vmatprep.subr.bf16.mxu0 0
      %989 = vmatpush1.bf16.msra.mxu0 0
      %990 = vmatprep.subr.bf16.mxu0 0
      %991 = vmatpush1.bf16.msra.mxu0 0
      %992 = vmatprep.subr.bf16.mxu0 0
      %993 = vmatpush1.bf16.msra.mxu0 0
      %994 = vmatprep.subr.bf16.mxu0 0
      %995 = vmatpush1.bf16.msra.mxu0 0
      %996 = vmatprep.subr.bf16.mxu0 0
      %997 = vmatpush1.bf16.msra.mxu0 0
      %998 = vmatprep.subr.bf16.mxu0 0
      %999 = vmatpush1.bf16.msra.mxu0 0
      %1000 = vmatprep.mubr.bf16.mxu0 0
      %1001 = vmatmul.mubr.bf16.gmra.mrb[0].mxu0 %v899
      %v1002 = vpop.f32.mrb[0].mxu0
      %v1003 = vadd.f32 0.0, %v1002
      %v1004 = vpop.f32.mrb[0].mxu0
      %v1005 = vadd.f32 0.0, %v1004
      %v1006 = vpop.f32.mrb[0].mxu0
      %v1007 = vadd.f32 0.0, %v1006
      %v1008 = vpop.f32.mrb[0].mxu0
      %v1009 = vadd.f32 0.0, %v1008
      %1010 = vmatprep.mubr.bf16.mxu0 0
      %1011 = vmatmul.mubr.bf16.gmra.mrb[0].mxu0 %v900
      %v1012 = vpop.f32.mrb[0].mxu0
      %v1013 = vadd.f32 0.0, %v1012
      %v1014 = vpop.f32.mrb[0].mxu0
      %v1015 = vadd.f32 0.0, %v1014
      %v1016 = vpop.f32.mrb[0].mxu0
      %v1017 = vadd.f32 0.0, %v1016
      %v1018 = vpop.f32.mrb[0].mxu0
      %v1019 = vadd.f32 0.0, %v1018
      %1020 = vmatprep.mubr.bf16.mxu0 0
      %1021 = vmatmul.mubr.bf16.gmra.mrb[0].mxu0 %v901
      %v1022 = vpop.f32.mrb[0].mxu0
      %v1023 = vadd.f32 0.0, %v1022
      %v1024 = vpop.f32.mrb[0].mxu0
      %v1025 = vadd.f32 0.0, %v1024
      %v1026 = vpop.f32.mrb[0].mxu0
      %v1027 = vadd.f32 0.0, %v1026
      %v1028 = vpop.f32.mrb[0].mxu0
      %v1029 = vadd.f32 0.0, %v1028
      %1030 = vdwg.mxu0
      %1031 = vmatprep.subr.bf16.mxu0 %v822
      %1032 = vmatpush1.bf16.msra.mxu0 %v821
      %1033 = vmatprep.subr.bf16.mxu0 %v830
      %1034 = vmatpush1.bf16.msra.mxu0 %v829
      %1035 = vmatprep.subr.bf16.mxu0 %v838
      %1036 = vmatpush1.bf16.msra.mxu0 %v837
      %1037 = vmatprep.subr.bf16.mxu0 %v846
      %1038 = vmatpush1.bf16.msra.mxu0 %v845
      %1039 = vmatprep.subr.bf16.mxu0 %v854
      %1040 = vmatpush1.bf16.msra.mxu0 %v853
      %1041 = vmatprep.subr.bf16.mxu0 %v862
      %1042 = vmatpush1.bf16.msra.mxu0 %v861
      %1043 = vmatprep.subr.bf16.mxu0 %v870
      %1044 = vmatpush1.bf16.msra.mxu0 %v869
      %1045 = vmatprep.subr.bf16.mxu0 %v878
      %1046 = vmatpush1.bf16.msra.mxu0 %v877
      %1047 = vmatprep.subr.bf16.mxu0 0
      %1048 = vmatpush1.bf16.msra.mxu0 0
      %1049 = vmatprep.subr.bf16.mxu0 0
      %1050 = vmatpush1.bf16.msra.mxu0 0
      %1051 = vmatprep.subr.bf16.mxu0 0
      %1052 = vmatpush1.bf16.msra.mxu0 0
      %1053 = vmatprep.subr.bf16.mxu0 0
      %1054 = vmatpush1.bf16.msra.mxu0 0
      %1055 = vmatprep.subr.bf16.mxu0 0
      %1056 = vmatpush1.bf16.msra.mxu0 0
      %1057 = vmatprep.subr.bf16.mxu0 0
      %1058 = vmatpush1.bf16.msra.mxu0 0
      %1059 = vmatprep.subr.bf16.mxu0 0
      %1060 = vmatpush1.bf16.msra.mxu0 0
      %1061 = vmatprep.subr.bf16.mxu0 0
      %1062 = vmatpush1.bf16.msra.mxu0 0
      %1063 = vmatprep.mubr.bf16.mxu0 0
      %1064 = vmatmul.mubr.bf16.gmra.mrb[0].mxu0 %v899
      %v1065 = vpop.f32.mrb[0].mxu0
      %v1066 = vadd.f32 0.0, %v1065
      %v1067 = vpop.f32.mrb[0].mxu0
      %v1068 = vadd.f32 0.0, %v1067
      %v1069 = vpop.f32.mrb[0].mxu0
      %v1070 = vadd.f32 0.0, %v1069
      %v1071 = vpop.f32.mrb[0].mxu0
      %v1072 = vadd.f32 0.0, %v1071
      %1073 = vmatprep.mubr.bf16.mxu0 0
      %1074 = vmatmul.mubr.bf16.gmra.mrb[0].mxu0 %v900
      %v1075 = vpop.f32.mrb[0].mxu0
      %v1076 = vadd.f32 0.0, %v1075
      %v1077 = vpop.f32.mrb[0].mxu0
      %v1078 = vadd.f32 0.0, %v1077
      %v1079 = vpop.f32.mrb[0].mxu0
      %v1080 = vadd.f32 0.0, %v1079
      %v1081 = vpop.f32.mrb[0].mxu0
      %v1082 = vadd.f32 0.0, %v1081
      %1083 = vmatprep.mubr.bf16.mxu0 0
      %1084 = vmatmul.mubr.bf16.gmra.mrb[0].mxu0 %v901
      %v1085 = vpop.f32.mrb[0].mxu0
      %v1086 = vadd.f32 0.0, %v1085
      %v1087 = vpop.f32.mrb[0].mxu0
      %v1088 = vadd.f32 0.0, %v1087
      %v1089 = vpop.f32.mrb[0].mxu0
      %v1090 = vadd.f32 0.0, %v1089
      %v1091 = vpop.f32.mrb[0].mxu0
      %v1092 = vadd.f32 0.0, %v1091
      %1093 = vdwg.mxu0
      %1094 = vmatprep.subr.bf16.mxu0 %v824
      %1095 = vmatpush1.bf16.msra.mxu0 %v823
      %1096 = vmatprep.subr.bf16.mxu0 %v832
      %1097 = vmatpush1.bf16.msra.mxu0 %v831
      %1098 = vmatprep.subr.bf16.mxu0 %v840
      %1099 = vmatpush1.bf16.msra.mxu0 %v839
      %1100 = vmatprep.subr.bf16.mxu0 %v848
      %1101 = vmatpush1.bf16.msra.mxu0 %v847
      %1102 = vmatprep.subr.bf16.mxu0 %v856
      %1103 = vmatpush1.bf16.msra.mxu0 %v855
      %1104 = vmatprep.subr.bf16.mxu0 %v864
      %1105 = vmatpush1.bf16.msra.mxu0 %v863
      %1106 = vmatprep.subr.bf16.mxu0 %v872
      %1107 = vmatpush1.bf16.msra.mxu0 %v871
      %1108 = vmatprep.subr.bf16.mxu0 %v880
      %1109 = vmatpush1.bf16.msra.mxu0 %v879
      %1110 = vmatprep.subr.bf16.mxu0 0
      %1111 = vmatpush1.bf16.msra.mxu0 0
      %1112 = vmatprep.subr.bf16.mxu0 0
      %1113 = vmatpush1.bf16.msra.mxu0 0
      %1114 = vmatprep.subr.bf16.mxu0 0
      %1115 = vmatpush1.bf16.msra.mxu0 0
      %1116 = vmatprep.subr.bf16.mxu0 0
      %1117 = vmatpush1.bf16.msra.mxu0 0
      %1118 = vmatprep.subr.bf16.mxu0 0
      %1119 = vmatpush1.bf16.msra.mxu0 0
      %1120 = vmatprep.subr.bf16.mxu0 0
      %1121 = vmatpush1.bf16.msra.mxu0 0
      %1122 = vmatprep.subr.bf16.mxu0 0
      %1123 = vmatpush1.bf16.msra.mxu0 0
      %1124 = vmatprep.subr.bf16.mxu0 0
      %1125 = vmatpush1.bf16.msra.mxu0 0
      %1126 = vmatprep.mubr.bf16.mxu0 0
      %1127 = vmatmul.mubr.bf16.gmra.mrb[0].mxu0 %v899
      %v1128 = vpop.f32.mrb[0].mxu0
      %v1129 = vadd.f32 0.0, %v1128
      %v1130 = vpop.f32.mrb[0].mxu0
      %v1131 = vadd.f32 0.0, %v1130
      %v1132 = vpop.f32.mrb[0].mxu0
      %v1133 = vadd.f32 0.0, %v1132
      %v1134 = vpop.f32.mrb[0].mxu0
      %v1135 = vadd.f32 0.0, %v1134
      %1136 = vmatprep.mubr.bf16.mxu0 0
      %1137 = vmatmul.mubr.bf16.gmra.mrb[0].mxu0 %v900
      %v1138 = vpop.f32.mrb[0].mxu0
      %v1139 = vadd.f32 0.0, %v1138
      %v1140 = vpop.f32.mrb[0].mxu0
      %v1141 = vadd.f32 0.0, %v1140
      %v1142 = vpop.f32.mrb[0].mxu0
      %v1143 = vadd.f32 0.0, %v1142
      %v1144 = vpop.f32.mrb[0].mxu0
      %v1145 = vadd.f32 0.0, %v1144
      %1146 = vmatprep.mubr.bf16.mxu0 0
      %1147 = vmatmul.mubr.bf16.gmra.mrb[0].mxu0 %v901
      %v1148 = vpop.f32.mrb[0].mxu0
      %v1149 = vadd.f32 0.0, %v1148
      %v1150 = vpop.f32.mrb[0].mxu0
      %v1151 = vadd.f32 0.0, %v1150
      %v1152 = vpop.f32.mrb[0].mxu0
      %v1153 = vadd.f32 0.0, %v1152
      %v1154 = vpop.f32.mrb[0].mxu0
      %v1155 = vadd.f32 0.0, %v1154
      %1156 = vdwg.mxu0
      %v1157 = vadd.f32 %v940, %v950
      %v1158 = vadd.f32 %v942, %v952
      %v1159 = vadd.f32 %v1003, %v1013
      %v1160 = vadd.f32 %v1005, %v1015
      %v1161 = vadd.f32 %v1066, %v1076
      %v1162 = vadd.f32 %v1068, %v1078
      %v1163 = vadd.f32 %v1129, %v1139
      %v1164 = vadd.f32 %v1131, %v1141
      %v1165 = vadd.f32 %v944, %v954
      %v1166 = vadd.f32 %v946, %v956
      %v1167 = vadd.f32 %v1007, %v1017
      %v1168 = vadd.f32 %v1009, %v1019
      %v1169 = vadd.f32 %v1070, %v1080
      %v1170 = vadd.f32 %v1072, %v1082
      %v1171 = vadd.f32 %v1133, %v1143
      %v1172 = vadd.f32 %v1135, %v1145
      %v1173 = vadd.f32 %v1157, %v960
      %v1174 = vadd.f32 %v1158, %v962
      %v1175 = vadd.f32 %v1159, %v1023
      %v1176 = vadd.f32 %v1160, %v1025
      %v1177 = vadd.f32 %v1161, %v1086
      %v1178 = vadd.f32 %v1162, %v1088
      %v1179 = vadd.f32 %v1163, %v1149
      %v1180 = vadd.f32 %v1164, %v1151
      %v1181 = vadd.f32 %v1165, %v964
      %v1182 = vadd.f32 %v1166, %v966
      %v1183 = vadd.f32 %v1167, %v1027
      %v1184 = vadd.f32 %v1168, %v1029
      %v1185 = vadd.f32 %v1169, %v1090
      %v1186 = vadd.f32 %v1170, %v1092
      %v1187 = vadd.f32 %v1171, %v1153
      %v1188 = vadd.f32 %v1172, %v1155
      %v1189 = vlaneseq
      %v1190 = vshrl.u32 %v1189, 7
      %v1191 = vsub.s32 4, %v1190
      %v1192 = vrot.slane %v190, %v1191
      %v1193 = vlaneseq
      %v1194 = vshrl.u32 %v1193, 7
      %v1195 = vsub.s32 4, %v1194
      %v1196 = vrot.slane %v191, %v1195
      %v1197 = vlaneseq
      %v1198 = vshrl.u32 %v1197, 7
      %v1199 = vsub.s32 4, %v1198
      %v1200 = vrot.slane %v326, %v1199
      %v1201 = vlaneseq
      %v1202 = vshrl.u32 %v1201, 7
      %v1203 = vsub.s32 4, %v1202
      %v1204 = vrot.slane %v327, %v1203
      %v1205 = vlaneseq
      %v1206 = vshrl.u32 %v1205, 7
      %v1207 = vsub.s32 4, %v1206
      %v1208 = vrot.slane %v330, %v1207
      %v1209 = vlaneseq
      %v1210 = vshrl.u32 %v1209, 7
      %v1211 = vsub.s32 4, %v1210
      %v1212 = vrot.slane %v331, %v1211
      %v1213 = vlaneseq
      %v1214 = vshrl.u32 %v1213, 7
      %v1215 = vsub.s32 4, %v1214
      %v1216 = vrot.slane %v334, %v1215
      %v1217 = vlaneseq
      %v1218 = vshrl.u32 %v1217, 7
      %v1219 = vsub.s32 4, %v1218
      %v1220 = vrot.slane %v335, %v1219
      %v1221 = vmul.f32 %v1192, %v1173
      %v1222 = vmul.f32 %v1196, %v1174
      %v1223 = vmul.f32 %v1200, %v1175
      %v1224 = vmul.f32 %v1204, %v1176
      %v1225 = vmul.f32 %v1208, %v1177
      %v1226 = vmul.f32 %v1212, %v1178
      %v1227 = vmul.f32 %v1216, %v1179
      %v1228 = vmul.f32 %v1220, %v1180
      %v1229 = vlaneseq
      %v1230 = vshrl.u32 %v1229, 7
      %v1231 = vsub.s32 0, %v1230
      %v1232 = vrot.slane %v192, %v1231
      %v1233 = vlaneseq
      %v1234 = vshrl.u32 %v1233, 7
      %v1235 = vsub.s32 0, %v1234
      %v1236 = vrot.slane %v193, %v1235
      %v1237 = vlaneseq
      %v1238 = vshrl.u32 %v1237, 7
      %v1239 = vsub.s32 0, %v1238
      %v1240 = vrot.slane %v340, %v1239
      %v1241 = vlaneseq
      %v1242 = vshrl.u32 %v1241, 7
      %v1243 = vsub.s32 0, %v1242
      %v1244 = vrot.slane %v341, %v1243
      %v1245 = vlaneseq
      %v1246 = vshrl.u32 %v1245, 7
      %v1247 = vsub.s32 0, %v1246
      %v1248 = vrot.slane %v344, %v1247
      %v1249 = vlaneseq
      %v1250 = vshrl.u32 %v1249, 7
      %v1251 = vsub.s32 0, %v1250
      %v1252 = vrot.slane %v345, %v1251
      %v1253 = vlaneseq
      %v1254 = vshrl.u32 %v1253, 7
      %v1255 = vsub.s32 0, %v1254
      %v1256 = vrot.slane %v348, %v1255
      %v1257 = vlaneseq
      %v1258 = vshrl.u32 %v1257, 7
      %v1259 = vsub.s32 0, %v1258
      %v1260 = vrot.slane %v349, %v1259
      %v1261 = vmul.f32 %v1232, %v1173
      %v1262 = vmul.f32 %v1236, %v1174
      %v1263 = vmul.f32 %v1240, %v1175
      %v1264 = vmul.f32 %v1244, %v1176
      %v1265 = vmul.f32 %v1248, %v1177
      %v1266 = vmul.f32 %v1252, %v1178
      %v1267 = vmul.f32 %v1256, %v1179
      %v1268 = vmul.f32 %v1260, %v1180
      %v1277 = vrot.slane %v1261, 4
      %v1278 = vrot.slane %v1262, 4
      %v1279 = vrot.slane %v1263, 4
      %v1280 = vrot.slane %v1264, 4
      %v1281 = vrot.slane %v1265, 4
      %v1282 = vrot.slane %v1266, 4
      %v1283 = vrot.slane %v1267, 4
      %v1284 = vrot.slane %v1268, 4
      %v1293 = vadd.f32 %v1221, %v1277
      %v1294 = vadd.f32 %v1222, %v1278
      %v1295 = vadd.f32 %v1223, %v1279
      %v1296 = vadd.f32 %v1224, %v1280
      %v1297 = vadd.f32 %v1225, %v1281
      %v1298 = vadd.f32 %v1226, %v1282
      %v1299 = vadd.f32 %v1227, %v1283
      %v1300 = vadd.f32 %v1228, %v1284
      %v1301 = vlaneseq
      %v1302 = vshrl.u32 %v1301, 7
      %v1303 = vsub.s32 4, %v1302
      %v1304 = vrot.slane %v192, %v1303
      %v1305 = vlaneseq
      %v1306 = vshrl.u32 %v1305, 7
      %v1307 = vsub.s32 4, %v1306
      %v1308 = vrot.slane %v193, %v1307
      %v1309 = vlaneseq
      %v1310 = vshrl.u32 %v1309, 7
      %v1311 = vsub.s32 4, %v1310
      %v1312 = vrot.slane %v340, %v1311
      %v1313 = vlaneseq
      %v1314 = vshrl.u32 %v1313, 7
      %v1315 = vsub.s32 4, %v1314
      %v1316 = vrot.slane %v341, %v1315
      %v1317 = vlaneseq
      %v1318 = vshrl.u32 %v1317, 7
      %v1319 = vsub.s32 4, %v1318
      %v1320 = vrot.slane %v344, %v1319
      %v1321 = vlaneseq
      %v1322 = vshrl.u32 %v1321, 7
      %v1323 = vsub.s32 4, %v1322
      %v1324 = vrot.slane %v345, %v1323
      %v1325 = vlaneseq
      %v1326 = vshrl.u32 %v1325, 7
      %v1327 = vsub.s32 4, %v1326
      %v1328 = vrot.slane %v348, %v1327
      %v1329 = vlaneseq
      %v1330 = vshrl.u32 %v1329, 7
      %v1331 = vsub.s32 4, %v1330
      %v1332 = vrot.slane %v349, %v1331
      %v1333 = vmul.f32 %v1304, %v1181
      %v1334 = vmul.f32 %v1308, %v1182
      %v1335 = vmul.f32 %v1312, %v1183
      %v1336 = vmul.f32 %v1316, %v1184
      %v1337 = vmul.f32 %v1320, %v1185
      %v1338 = vmul.f32 %v1324, %v1186
      %v1339 = vmul.f32 %v1328, %v1187
      %v1340 = vmul.f32 %v1332, %v1188
      %v1341 = vadd.f32 %v1293, %v1333
      %v1342 = vadd.f32 %v1294, %v1334
      %v1343 = vadd.f32 %v1295, %v1335
      %v1344 = vadd.f32 %v1296, %v1336
      %v1345 = vadd.f32 %v1297, %v1337
      %v1346 = vadd.f32 %v1298, %v1338
      %v1347 = vadd.f32 %v1299, %v1339
      %v1348 = vadd.f32 %v1300, %v1340
      %v1349 = vlaneseq
      %v1350 = vshrl.u32 %v1349, 7
      %v1351 = vsub.s32 0, %v1350
      %v1352 = vrot.slane %v281, %v1351
      %v1353 = vlaneseq
      %v1354 = vshrl.u32 %v1353, 7
      %v1355 = vsub.s32 0, %v1354
      %v1356 = vrot.slane %v282, %v1355
      %v1357 = vmul.f32 %v1352, %v1341
      %v1358 = vmul.f32 %v1356, %v1342
      %v1359 = vlaneseq
      %v1360 = vshrl.u32 %v1359, 7
      %v1361 = vsub.s32 1, %v1360
      %v1362 = vrot.slane %v281, %v1361
      %v1363 = vlaneseq
      %v1364 = vshrl.u32 %v1363, 7
      %v1365 = vsub.s32 1, %v1364
      %v1366 = vrot.slane %v282, %v1365
      %v1367 = vmul.f32 %v1362, %v1343
      %v1368 = vmul.f32 %v1366, %v1344
      %v1369 = vadd.f32 %v1357, %v1367
      %v1370 = vadd.f32 %v1358, %v1368
      %v1371 = vlaneseq
      %v1372 = vshrl.u32 %v1371, 7
      %v1373 = vsub.s32 2, %v1372
      %v1374 = vrot.slane %v281, %v1373
      %v1375 = vlaneseq
      %v1376 = vshrl.u32 %v1375, 7
      %v1377 = vsub.s32 2, %v1376
      %v1378 = vrot.slane %v282, %v1377
      %v1379 = vmul.f32 %v1374, %v1345
      %v1380 = vmul.f32 %v1378, %v1346
      %v1381 = vadd.f32 %v1369, %v1379
      %v1382 = vadd.f32 %v1370, %v1380
      %v1383 = vlaneseq
      %v1384 = vshrl.u32 %v1383, 7
      %v1385 = vsub.s32 3, %v1384
      %v1386 = vrot.slane %v281, %v1385
      %v1387 = vlaneseq
      %v1388 = vshrl.u32 %v1387, 7
      %v1389 = vsub.s32 3, %v1388
      %v1390 = vrot.slane %v282, %v1389
      %v1391 = vmul.f32 %v1386, %v1347
      %v1392 = vmul.f32 %v1390, %v1348
      %v1393 = vadd.f32 %v1381, %v1391
      %v1394 = vadd.f32 %v1382, %v1392
      %v1395 = vrcp.pop %v308
      %v1396 = vrcp.pop %v309
      %v1397 = vadd.f32 %v1393, %v291
      %v1398 = vadd.f32 %v1394, %v292
      %v1399 = vmul.f32 %v1397, %v1395
      %v1400 = vmul.f32 %v1398, %v1396
      %v1401 = vsub.f32 1.0, %v235
      %v1402 = vsub.f32 1.0, %v236
      %v1405 = vrot.slane %v1401, 5
      %v1406 = vrot.slane %v1402, 5
      %vm1409 = vcmask 1041408
      %v1410 = vsel %vm1409, %v1399, %v1399
      %v1411 = vsel %vm1409, %v1400, %v1400
      %vm1412 = vcmask 1042432
      %v1413 = vsel %vm1412, %v1410, %v1405
      %v1414 = vsel %vm1412, %v1411, %v1406
      %v1417 = vcombine.low %v1413, %v1414
      %1419 = vst [vmem:[%s181] sm:$0xff] %v1417
      %s1420 = smul.u32 2, %s18
      %p1421 = scmp.lt.s32.totalorder %s17, 1
      %s1422 = scalar_select %p1421, %s17, 1
      %p1423 = scmp.lt.s32.totalorder %s1420, 1
      %s1424 = scalar_select %p1423, %s1420, 1
      %s1425 = smul.addr %s1422, 2
      %s1426 = sadd.s32 %s1424, %s1425
      %s1427 = smul.addr %s1426, 4
      %s1428 = scalar_lea.vmem %s2, %s1427
      // Predicated region
      $region29: #{normal_shader_forward.1} parent=27 // pred_check
        %p1429 = pneg %p94
      $region30: #{normal_shader_forward.1} parent=27 // pred_check_branch
        %1431 = sbr.rel (%p1429) target = $region32
      $region31: #{normal_shader_forward.1} parent=27 // pred_region
        %s1432 = smul.u32 2, %s18
      $region32: #{normal_shader_forward.1} parent=27 // pred_fallthru
        _
    $region28: #{normal_shader_forward.1} parent=5 // pred_fallthru
      _
    %p1433 = scmp.le.s32.totalorder 2, %s8
    // Predicated region
    $region33: #{normal_shader_forward.1} parent=5 // pred_check
      %p1434 = pneg %p1433
    $region34: #{normal_shader_forward.1} parent=5 // pred_check_branch
      %1436 = sbr.rel (%p1434) target = $region36
    $region35: #{normal_shader_forward.1} parent=5 // pred_region
      %s1437 = ssub.s32 %s8, 2
      // Predicated region
      $region37: #{normal_shader_forward.1} parent=35 // pred_check
        %p1438 = pneg %p100
      $region38: #{normal_shader_forward.1} parent=35 // pred_check_branch
        %1440 = sbr.rel (%p1438) target = $region40
      $region39: #{normal_shader_forward.1} parent=35 // pred_region
        %s1441 = smul.u32 2, %s20
        %p1442 = scmp.lt.s32.totalorder %s19, 1
        %s1443 = scalar_select %p1442, %s19, 1
        %p1444 = scmp.lt.s32.totalorder %s1441, 1
        %s1445 = scalar_select %p1444, %s1441, 1
        %s1446 = smul.addr %s1443, 2
        %s1447 = sadd.s32 %s1445, %s1446
        %s1448 = smul.addr %s1447, 4
        %s1449 = scalar_lea.vmem %s2, %s1448
      $region40: #{normal_shader_forward.1} parent=35 // pred_fallthru
        _
    $region36: #{normal_shader_forward.1} parent=5 // pred_fallthru
      _
  $region6: #{normal_shader_forward.1} parent=0 // loop_footer
    %s12 = sadd.s32 1, %s8
  $region7: #{normal_shader_forward.1} parent=0 // loop_footer_branch
    %7 = sbr.rel target = $region3
  $region8: #{normal_shader_forward.1} parent=0 // loop_exit
    _

</llo_original>
